<compile_context>
chip_gen: v7x
topology: tpu7x:2x2x1
jax: 0.10.0
libtpu: 0.0.40
codegen_flags: <defaults>
</compile_context>

<pallas_src>
import functools

import jax
import jax.numpy as jnp
import numpy as np
from jax import lax
from jax.experimental import pallas as pl
from jax.experimental.pallas import tpu as pltpu


def _basic_block_kernel(x_ref, w1_ref, b1_ref, w2_ref, b2_ref, out_ref, *, H, W):
    """Fused BasicBlock over the whole (batch-folded) activation slab.

    x_ref   : (N*C, H*W)        flattened NCHW input (spatial in lanes)
    w1_ref  : (9, N*C, N*C)     per-tap batch-block-diagonal conv1 weights
                                (BN1 scale folded in); tap t = kh*3 + kw
    b1_ref  : (N*C, 1)          folded BN1 shift (per output row)
    w2_ref  : (9, N*C, N*C)     conv2 weights, BN2 scale folded
    b2_ref  : (N*C, 1)          folded BN2 shift
    out_ref : (N*C, H*W)
    """
    HW = H * W
    NC = x_ref.shape[0]

    # Per-tap validity masks (computed once; reused by both convs).  The roll
    # below wraps circularly, so out-of-image taps must be zeroed explicitly.
    col = lax.broadcasted_iota(jnp.int32, (1, HW), 1)
    w_idx = col % W
    vert = (col >= W, None, col < (H - 1) * W)          # kh = 0, 1, 2
    horiz = (w_idx >= 1, None, w_idx <= W - 2)          # kw = 0, 1, 2
    masks = {}
    for kh in range(3):
        for kw in range(3):
            vm, hm = vert[kh], horiz[kw]
            if vm is None:
                masks[(kh, kw)] = hm
            elif hm is None:
                masks[(kh, kw)] = vm
            else:
                masks[(kh, kw)] = jnp.logical_and(vm, hm)

    def conv3x3(x, w_ref):
        # 3x3 conv, padding=1: 9 lane-rolled copies of the full tile, each
        # masked once, each mixed across channels with one small MXU dot.
        accs = [jnp.zeros((NC, HW), jnp.float32) for _ in range(3)]
        for kh in range(3):
            for kw in range(3):
                t = kh * 3 + kw
                off = (kh - 1) * W + (kw - 1)
                xs = x if off == 0 else pltpu.roll(x, (-off) % HW, axis=1)
                m = masks[(kh, kw)]
                if m is not None:
                    xs = jnp.where(m, xs, 0.0)
                accs[kh] = accs[kh] + jnp.dot(
                    w_ref[t], xs, preferred_element_type=jnp.float32)
        return accs[0] + accs[1] + accs[2]

    x = x_ref[...]                                       # (N*C, HW) f32

    # conv1 (+ folded BN1 shift) + ReLU
    y1 = jnp.maximum(conv3x3(x, w1_ref) + b1_ref[...], 0.0)

    # conv2 + folded BN2 shift + residual + ReLU; single unmasked lane-dense store.
    y2 = conv3x3(y1, w2_ref)
    out_ref[...] = jnp.maximum(y2 + b2_ref[...] + x, 0.0).astype(out_ref.dtype)


def basic_block_forward(x_nchw, params):
    """Runs the BasicBlock forward pass. x_nchw: (N, C, H, W) float32."""
    eps = 1e-5
    N, C, H, W = x_nchw.shape
    HW = H * W
    NC = N * C

    w1 = params["conv1_w"].astype(jnp.float32)           # (Cout, Cin, 3, 3)
    w2 = params["conv2_w"].astype(jnp.float32)
    # TODO(synk): stride>1 / downsample path of BasicBlock is not implemented
    # (only the default stride=1, downsample=None, Cin==Cout config).
    assert w1.shape == (C, C, 3, 3) and w2.shape == (C, C, 3, 3)

    # Fold eval-mode BatchNorm scale into the conv weights; keep only shifts.
    # TODO(synk): training-mode BN (batch statistics) is not implemented.
    s1 = params["bn1_gamma"] / jnp.sqrt(params["bn1_var"] + eps)
    b1 = params["bn1_beta"] - params["bn1_mean"] * s1
    s2 = params["bn2_gamma"] / jnp.sqrt(params["bn2_var"] + eps)
    b2 = params["bn2_beta"] - params["bn2_mean"] * s2

    eye_n = jnp.eye(N, dtype=jnp.float32)

    def pack_taps(w, scale):
        # (Cout,Cin,3,3) * scale -> per-tap (9, Cout, Cin), then block-diag
        # over the folded batch -> (9, N*Cout, N*Cin).  No in-kernel transpose.
        ws = w * scale[:, None, None, None]
        taps = jnp.transpose(ws, (2, 3, 0, 1)).reshape(9, C, C)
        return jax.vmap(lambda t: jnp.kron(eye_n, t))(taps).astype(jnp.float32)

    w1_taps = pack_taps(w1, s1)                           # (9, NC, NC)
    w2_taps = pack_taps(w2, s2)
    b1c = jnp.tile(b1, N).reshape(NC, 1).astype(jnp.float32)
    b2c = jnp.tile(b2, N).reshape(NC, 1).astype(jnp.float32)

    # NCHW kept end-to-end; fold batch+channel into sublanes, spatial into
    # lanes (free reshape): (N*C, H*W) = fully dense (8, 256) slab.
    x2d = x_nchw.reshape(NC, HW).astype(jnp.float32)

    kernel = functools.partial(_basic_block_kernel, H=H, W=W)
    vmem = pltpu.MemorySpace.VMEM
    out2d = pl.pallas_call(
        kernel,
        out_shape=jax.ShapeDtypeStruct((NC, HW), jnp.float32),
        in_specs=[
            pl.BlockSpec(memory_space=vmem),              # x
            pl.BlockSpec(memory_space=vmem),              # w1 taps
            pl.BlockSpec(memory_space=vmem),              # b1
            pl.BlockSpec(memory_space=vmem),              # w2 taps
            pl.BlockSpec(memory_space=vmem),              # b2
        ],
        out_specs=pl.BlockSpec(memory_space=vmem),
    )(x2d, w1_taps, b1c, w2_taps, b2c)

    return out2d.reshape(N, C, H, W)


def _reference_forward(x, params):
    """Pure-JAX reference (lax.conv, NCHW) for correctness check."""
    eps = 1e-5
    dn = lax.conv_dimension_numbers(x.shape, params["conv1_w"].shape,
                                    ("NCHW", "OIHW", "NCHW"))

    def bn(y, g, b, m, v):
        g, b, m, v = (t.reshape(1, -1, 1, 1) for t in (g, b, m, v))
        return (y - m) / jnp.sqrt(v + eps) * g + b

    out = lax.conv_general_dilated(x, params["conv1_w"], (1, 1), ((1, 1), (1, 1)),
                                   dimension_numbers=dn)
    out = jnp.maximum(bn(out, params["bn1_gamma"], params["bn1_beta"],
                         params["bn1_mean"], params["bn1_var"]), 0.0)
    out = lax.conv_general_dilated(out, params["conv2_w"], (1, 1), ((1, 1), (1, 1)),
                                   dimension_numbers=dn)
    out = bn(out, params["bn2_gamma"], params["bn2_beta"],
             params["bn2_mean"], params["bn2_var"])
    return jnp.maximum(out + x, 0.0)


if __name__ == "__main__":
    # Small shapes consistent with BasicBlock(4, 4): batch=2, channels=4,
    # spatial 16x16 (stride=1, downsample=None).
    N, C, H, W = 2, 4, 16, 16

    key = jax.random.PRNGKey(0)
    k = jax.random.split(key, 9)

    params = {
        # PyTorch layout (Cout, Cin, 3, 3)
        "conv1_w": jax.random.normal(k[0], (C, C, 3, 3), jnp.float32) * 0.1,
        "conv2_w": jax.random.normal(k[1], (C, C, 3, 3), jnp.float32) * 0.1,
        "bn1_gamma": 1.0 + 0.1 * jax.random.normal(k[2], (C,), jnp.float32),
        "bn1_beta": 0.1 * jax.random.normal(k[3], (C,), jnp.float32),
        "bn1_mean": 0.1 * jax.random.normal(k[4], (C,), jnp.float32),
        "bn1_var": jnp.abs(jax.random.normal(k[5], (C,), jnp.float32)) + 0.5,
        "bn2_gamma": 1.0 + 0.1 * jax.random.normal(k[6], (C,), jnp.float32),
        "bn2_beta": 0.1 * jax.random.normal(k[7], (C,), jnp.float32),
        "bn2_mean": jnp.zeros((C,), jnp.float32),
        "bn2_var": jnp.ones((C,), jnp.float32),
    }

    x = jax.random.normal(k[8], (N, C, H, W), jnp.float32)

    out = jax.block_until_ready(basic_block_forward(x, params))
    ref = jax.block_until_ready(_reference_forward(x, params))

    assert out.shape == (N, C, H, W)
    np.testing.assert_allclose(np.asarray(out), np.asarray(ref),
                               rtol=5e-4, atol=5e-4)

    print("KERNEL_OK")
</pallas_src>

<mosaic_0001>
module attributes {stable_mosaic.version = 11 : i64} {
  func.func @_basic_block_kernel(%arg0: memref<8x256xf32, #tpu.memory_space<vmem>>, %arg1: memref<9x8x8xf32, #tpu.memory_space<vmem>>, %arg2: memref<8x1xf32, #tpu.memory_space<vmem>>, %arg3: memref<9x8x8xf32, #tpu.memory_space<vmem>>, %arg4: memref<8x1xf32, #tpu.memory_space<vmem>>, %arg5: memref<8x256xf32, #tpu.memory_space<vmem>>) attributes {dimension_semantics = [], scalar_prefetch = 0 : i64, scratch_operands = 0 : i64, tpu.core_type = #tpu.core_type<tc>} {
    %0 = tpu.iota {dimensions = array<i32: 1>} : vector<1x256xi32>
    %c16_i32 = arith.constant 16 : i32
    %c0_i32 = arith.constant 0 : i32
    %1 = arith.cmpi eq, %c16_i32, %c0_i32 : i32
    %c1_i32 = arith.constant 1 : i32
    %2 = arith.select %1, %c1_i32, %c16_i32 : i32
    %3 = vector.broadcast %2 : i32 to vector<1x256xi32>
    %4 = arith.remsi %0, %3 : vector<1x256xi32>
    %c0_i32_0 = arith.constant 0 : i32
    %5 = vector.broadcast %c0_i32_0 : i32 to vector<1x256xi32>
    %6 = arith.cmpi ne, %4, %5 : vector<1x256xi32>
    %c0_i32_1 = arith.constant 0 : i32
    %7 = vector.broadcast %c0_i32_1 : i32 to vector<1x256xi32>
    %8 = arith.cmpi slt, %4, %7 : vector<1x256xi32>
    %c0_i32_2 = arith.constant 0 : i32
    %9 = arith.cmpi slt, %2, %c0_i32_2 : i32
    %10 = vector.broadcast %9 : i1 to vector<1x256xi1>
    %11 = vector.broadcast %10 : vector<1x256xi1> to vector<1x256xi1>
    %12 = arith.xori %8, %11 : vector<1x256xi1>
    %13 = arith.andi %12, %6 : vector<1x256xi1>
    %14 = vector.broadcast %2 : i32 to vector<1x256xi32>
    %15 = arith.addi %4, %14 : vector<1x256xi32>
    %16 = arith.select %13, %15, %4 : vector<1x256xi1>, vector<1x256xi32>
    %c16_i32_3 = arith.constant 16 : i32
    %17 = vector.broadcast %c16_i32_3 : i32 to vector<1x256xi32>
    %18 = arith.cmpi sge, %0, %17 : vector<1x256xi32>
    %c240_i32 = arith.constant 240 : i32
    %19 = vector.broadcast %c240_i32 : i32 to vector<1x256xi32>
    %20 = arith.cmpi slt, %0, %19 : vector<1x256xi32>
    %c1_i32_4 = arith.constant 1 : i32
    %21 = vector.broadcast %c1_i32_4 : i32 to vector<1x256xi32>
    %22 = arith.cmpi sge, %16, %21 : vector<1x256xi32>
    %c14_i32 = arith.constant 14 : i32
    %23 = vector.broadcast %c14_i32 : i32 to vector<1x256xi32>
    %24 = arith.cmpi sle, %16, %23 : vector<1x256xi32>
    %25 = arith.andi %18, %22 : vector<1x256xi1>
    %26 = arith.andi %18, %24 : vector<1x256xi1>
    %27 = arith.andi %20, %22 : vector<1x256xi1>
    %28 = arith.andi %20, %24 : vector<1x256xi1>
    %c0 = arith.constant 0 : index
    %c0_5 = arith.constant 0 : index
    %29 = vector.load %arg0[%c0, %c0_5] : memref<8x256xf32, #tpu.memory_space<vmem>>, vector<8x256xf32>
    %cst = arith.constant 0.000000e+00 : f32
    %30 = vector.broadcast %cst : f32 to vector<8x256xf32>
    %cst_6 = arith.constant 0.000000e+00 : f32
    %31 = vector.broadcast %cst_6 : f32 to vector<8x256xf32>
    %cst_7 = arith.constant 0.000000e+00 : f32
    %32 = vector.broadcast %cst_7 : f32 to vector<8x256xf32>
    %c17_i32 = arith.constant 17 : i32
    %33 = tpu.dynamic_rotate %29 by %c17_i32 dim 1 : vector<8x256xf32>, i32 -> vector<8x256xf32>
    %cst_8 = arith.constant 0.000000e+00 : f32
    %34 = vector.shape_cast %25 : vector<1x256xi1> to vector<1x256xi1>
    %35 = vector.broadcast %34 : vector<1x256xi1> to vector<8x256xi1>
    %36 = vector.broadcast %cst_8 : f32 to vector<8x256xf32>
    %37 = arith.select %35, %33, %36 : vector<8x256xi1>, vector<8x256xf32>
    %c0_9 = arith.constant 0 : index
    %c0_10 = arith.constant 0 : index
    %c0_11 = arith.constant 0 : index
    %38 = vector.load %arg1[%c0_9, %c0_10, %c0_11] : memref<9x8x8xf32, #tpu.memory_space<vmem>>, vector<1x8x8xf32>
    %39 = vector.shape_cast %38 : vector<1x8x8xf32> to vector<8x8xf32>
    %cst_12 = arith.constant dense<0.000000e+00> : vector<8x256xf32>
    %40 = tpu.matmul %39, %37, %cst_12 {dimension_numbers = #tpu.dot_dimension_numbers<[1], [0], [0], [1], [0, 0, 1, 1], [], []>} : vector<8x8xf32>, vector<8x256xf32>, vector<8x256xf32> -> vector<8x256xf32>
    %41 = arith.addf %30, %40 : vector<8x256xf32>
    %c16_i32_13 = arith.constant 16 : i32
    %42 = tpu.dynamic_rotate %29 by %c16_i32_13 dim 1 : vector<8x256xf32>, i32 -> vector<8x256xf32>
    %cst_14 = arith.constant 0.000000e+00 : f32
    %43 = vector.shape_cast %18 : vector<1x256xi1> to vector<1x256xi1>
    %44 = vector.broadcast %43 : vector<1x256xi1> to vector<8x256xi1>
    %45 = vector.broadcast %cst_14 : f32 to vector<8x256xf32>
    %46 = arith.select %44, %42, %45 : vector<8x256xi1>, vector<8x256xf32>
    %c1 = arith.constant 1 : index
    %c0_15 = arith.constant 0 : index
    %c0_16 = arith.constant 0 : index
    %47 = vector.load %arg1[%c1, %c0_15, %c0_16] : memref<9x8x8xf32, #tpu.memory_space<vmem>>, vector<1x8x8xf32>
    %48 = vector.shape_cast %47 : vector<1x8x8xf32> to vector<8x8xf32>
    %cst_17 = arith.constant dense<0.000000e+00> : vector<8x256xf32>
    %49 = tpu.matmul %48, %46, %cst_17 {dimension_numbers = #tpu.dot_dimension_numbers<[1], [0], [0], [1], [0, 0, 1, 1], [], []>} : vector<8x8xf32>, vector<8x256xf32>, vector<8x256xf32> -> vector<8x256xf32>
    %50 = arith.addf %41, %49 : vector<8x256xf32>
    %c15_i32 = arith.constant 15 : i32
    %51 = tpu.dynamic_rotate %29 by %c15_i32 dim 1 : vector<8x256xf32>, i32 -> vector<8x256xf32>
    %cst_18 = arith.constant 0.000000e+00 : f32
    %52 = vector.shape_cast %26 : vector<1x256xi1> to vector<1x256xi1>
    %53 = vector.broadcast %52 : vector<1x256xi1> to vector<8x256xi1>
    %54 = vector.broadcast %cst_18 : f32 to vector<8x256xf32>
    %55 = arith.select %53, %51, %54 : vector<8x256xi1>, vector<8x256xf32>
    %c2 = arith.constant 2 : index
    %c0_19 = arith.constant 0 : index
    %c0_20 = arith.constant 0 : index
    %56 = vector.load %arg1[%c2, %c0_19, %c0_20] : memref<9x8x8xf32, #tpu.memory_space<vmem>>, vector<1x8x8xf32>
    %57 = vector.shape_cast %56 : vector<1x8x8xf32> to vector<8x8xf32>
    %cst_21 = arith.constant dense<0.000000e+00> : vector<8x256xf32>
    %58 = tpu.matmul %57, %55, %cst_21 {dimension_numbers = #tpu.dot_dimension_numbers<[1], [0], [0], [1], [0, 0, 1, 1], [], []>} : vector<8x8xf32>, vector<8x256xf32>, vector<8x256xf32> -> vector<8x256xf32>
    %59 = arith.addf %50, %58 : vector<8x256xf32>
    %c1_i32_22 = arith.constant 1 : i32
    %60 = tpu.dynamic_rotate %29 by %c1_i32_22 dim 1 : vector<8x256xf32>, i32 -> vector<8x256xf32>
    %cst_23 = arith.constant 0.000000e+00 : f32
    %61 = vector.shape_cast %22 : vector<1x256xi1> to vector<1x256xi1>
    %62 = vector.broadcast %61 : vector<1x256xi1> to vector<8x256xi1>
    %63 = vector.broadcast %cst_23 : f32 to vector<8x256xf32>
    %64 = arith.select %62, %60, %63 : vector<8x256xi1>, vector<8x256xf32>
    %c3 = arith.constant 3 : index
    %c0_24 = arith.constant 0 : index
    %c0_25 = arith.constant 0 : index
    %65 = vector.load %arg1[%c3, %c0_24, %c0_25] : memref<9x8x8xf32, #tpu.memory_space<vmem>>, vector<1x8x8xf32>
    %66 = vector.shape_cast %65 : vector<1x8x8xf32> to vector<8x8xf32>
    %cst_26 = arith.constant dense<0.000000e+00> : vector<8x256xf32>
    %67 = tpu.matmul %66, %64, %cst_26 {dimension_numbers = #tpu.dot_dimension_numbers<[1], [0], [0], [1], [0, 0, 1, 1], [], []>} : vector<8x8xf32>, vector<8x256xf32>, vector<8x256xf32> -> vector<8x256xf32>
    %68 = arith.addf %31, %67 : vector<8x256xf32>
    %c4 = arith.constant 4 : index
    %c0_27 = arith.constant 0 : index
    %c0_28 = arith.constant 0 : index
    %69 = vector.load %arg1[%c4, %c0_27, %c0_28] : memref<9x8x8xf32, #tpu.memory_space<vmem>>, vector<1x8x8xf32>
    %70 = vector.shape_cast %69 : vector<1x8x8xf32> to vector<8x8xf32>
    %cst_29 = arith.constant dense<0.000000e+00> : vector<8x256xf32>
    %71 = tpu.matmul %70, %29, %cst_29 {dimension_numbers = #tpu.dot_dimension_numbers<[1], [0], [0], [1], [0, 0, 1, 1], [], []>} : vector<8x8xf32>, vector<8x256xf32>, vector<8x256xf32> -> vector<8x256xf32>
    %72 = arith.addf %68, %71 : vector<8x256xf32>
    %c255_i32 = arith.constant 255 : i32
    %73 = tpu.dynamic_rotate %29 by %c255_i32 dim 1 : vector<8x256xf32>, i32 -> vector<8x256xf32>
    %cst_30 = arith.constant 0.000000e+00 : f32
    %74 = vector.shape_cast %24 : vector<1x256xi1> to vector<1x256xi1>
    %75 = vector.broadcast %74 : vector<1x256xi1> to vector<8x256xi1>
    %76 = vector.broadcast %cst_30 : f32 to vector<8x256xf32>
    %77 = arith.select %75, %73, %76 : vector<8x256xi1>, vector<8x256xf32>
    %c5 = arith.constant 5 : index
    %c0_31 = arith.constant 0 : index
    %c0_32 = arith.constant 0 : index
    %78 = vector.load %arg1[%c5, %c0_31, %c0_32] : memref<9x8x8xf32, #tpu.memory_space<vmem>>, vector<1x8x8xf32>
    %79 = vector.shape_cast %78 : vector<1x8x8xf32> to vector<8x8xf32>
    %cst_33 = arith.constant dense<0.000000e+00> : vector<8x256xf32>
    %80 = tpu.matmul %79, %77, %cst_33 {dimension_numbers = #tpu.dot_dimension_numbers<[1], [0], [0], [1], [0, 0, 1, 1], [], []>} : vector<8x8xf32>, vector<8x256xf32>, vector<8x256xf32> -> vector<8x256xf32>
    %81 = arith.addf %72, %80 : vector<8x256xf32>
    %c241_i32 = arith.constant 241 : i32
    %82 = tpu.dynamic_rotate %29 by %c241_i32 dim 1 : vector<8x256xf32>, i32 -> vector<8x256xf32>
    %cst_34 = arith.constant 0.000000e+00 : f32
    %83 = vector.shape_cast %27 : vector<1x256xi1> to vector<1x256xi1>
    %84 = vector.broadcast %83 : vector<1x256xi1> to vector<8x256xi1>
    %85 = vector.broadcast %cst_34 : f32 to vector<8x256xf32>
    %86 = arith.select %84, %82, %85 : vector<8x256xi1>, vector<8x256xf32>
    %c6 = arith.constant 6 : index
    %c0_35 = arith.constant 0 : index
    %c0_36 = arith.constant 0 : index
    %87 = vector.load %arg1[%c6, %c0_35, %c0_36] : memref<9x8x8xf32, #tpu.memory_space<vmem>>, vector<1x8x8xf32>
    %88 = vector.shape_cast %87 : vector<1x8x8xf32> to vector<8x8xf32>
    %cst_37 = arith.constant dense<0.000000e+00> : vector<8x256xf32>
    %89 = tpu.matmul %88, %86, %cst_37 {dimension_numbers = #tpu.dot_dimension_numbers<[1], [0], [0], [1], [0, 0, 1, 1], [], []>} : vector<8x8xf32>, vector<8x256xf32>, vector<8x256xf32> -> vector<8x256xf32>
    %90 = arith.addf %32, %89 : vector<8x256xf32>
    %c240_i32_38 = arith.constant 240 : i32
    %91 = tpu.dynamic_rotate %29 by %c240_i32_38 dim 1 : vector<8x256xf32>, i32 -> vector<8x256xf32>
    %cst_39 = arith.constant 0.000000e+00 : f32
    %92 = vector.shape_cast %20 : vector<1x256xi1> to vector<1x256xi1>
    %93 = vector.broadcast %92 : vector<1x256xi1> to vector<8x256xi1>
    %94 = vector.broadcast %cst_39 : f32 to vector<8x256xf32>
    %95 = arith.select %93, %91, %94 : vector<8x256xi1>, vector<8x256xf32>
    %c7 = arith.constant 7 : index
    %c0_40 = arith.constant 0 : index
    %c0_41 = arith.constant 0 : index
    %96 = vector.load %arg1[%c7, %c0_40, %c0_41] : memref<9x8x8xf32, #tpu.memory_space<vmem>>, vector<1x8x8xf32>
    %97 = vector.shape_cast %96 : vector<1x8x8xf32> to vector<8x8xf32>
    %cst_42 = arith.constant dense<0.000000e+00> : vector<8x256xf32>
    %98 = tpu.matmul %97, %95, %cst_42 {dimension_numbers = #tpu.dot_dimension_numbers<[1], [0], [0], [1], [0, 0, 1, 1], [], []>} : vector<8x8xf32>, vector<8x256xf32>, vector<8x256xf32> -> vector<8x256xf32>
    %99 = arith.addf %90, %98 : vector<8x256xf32>
    %c239_i32 = arith.constant 239 : i32
    %100 = tpu.dynamic_rotate %29 by %c239_i32 dim 1 : vector<8x256xf32>, i32 -> vector<8x256xf32>
    %cst_43 = arith.constant 0.000000e+00 : f32
    %101 = vector.shape_cast %28 : vector<1x256xi1> to vector<1x256xi1>
    %102 = vector.broadcast %101 : vector<1x256xi1> to vector<8x256xi1>
    %103 = vector.broadcast %cst_43 : f32 to vector<8x256xf32>
    %104 = arith.select %102, %100, %103 : vector<8x256xi1>, vector<8x256xf32>
    %c8 = arith.constant 8 : index
    %c0_44 = arith.constant 0 : index
    %c0_45 = arith.constant 0 : index
    %105 = vector.load %arg1[%c8, %c0_44, %c0_45] : memref<9x8x8xf32, #tpu.memory_space<vmem>>, vector<1x8x8xf32>
    %106 = vector.shape_cast %105 : vector<1x8x8xf32> to vector<8x8xf32>
    %cst_46 = arith.constant dense<0.000000e+00> : vector<8x256xf32>
    %107 = tpu.matmul %106, %104, %cst_46 {dimension_numbers = #tpu.dot_dimension_numbers<[1], [0], [0], [1], [0, 0, 1, 1], [], []>} : vector<8x8xf32>, vector<8x256xf32>, vector<8x256xf32> -> vector<8x256xf32>
    %108 = arith.addf %99, %107 : vector<8x256xf32>
    %109 = arith.addf %59, %81 : vector<8x256xf32>
    %110 = arith.addf %109, %108 : vector<8x256xf32>
    %c0_47 = arith.constant 0 : index
    %c0_48 = arith.constant 0 : index
    %111 = vector.load %arg2[%c0_47, %c0_48] : memref<8x1xf32, #tpu.memory_space<vmem>>, vector<8x1xf32>
    %112 = vector.broadcast %111 : vector<8x1xf32> to vector<8x256xf32>
    %113 = arith.addf %110, %112 : vector<8x256xf32>
    %cst_49 = arith.constant 0.000000e+00 : f32
    %114 = vector.broadcast %cst_49 : f32 to vector<8x256xf32>
    %115 = arith.maximumf %113, %114 : vector<8x256xf32>
    %cst_50 = arith.constant 0.000000e+00 : f32
    %116 = vector.broadcast %cst_50 : f32 to vector<8x256xf32>
    %cst_51 = arith.constant 0.000000e+00 : f32
    %117 = vector.broadcast %cst_51 : f32 to vector<8x256xf32>
    %cst_52 = arith.constant 0.000000e+00 : f32
    %118 = vector.broadcast %cst_52 : f32 to vector<8x256xf32>
    %c17_i32_53 = arith.constant 17 : i32
    %119 = tpu.dynamic_rotate %115 by %c17_i32_53 dim 1 : vector<8x256xf32>, i32 -> vector<8x256xf32>
    %cst_54 = arith.constant 0.000000e+00 : f32
    %120 = vector.shape_cast %25 : vector<1x256xi1> to vector<1x256xi1>
    %121 = vector.broadcast %120 : vector<1x256xi1> to vector<8x256xi1>
    %122 = vector.broadcast %cst_54 : f32 to vector<8x256xf32>
    %123 = arith.select %121, %119, %122 : vector<8x256xi1>, vector<8x256xf32>
    %c0_55 = arith.constant 0 : index
    %c0_56 = arith.constant 0 : index
    %c0_57 = arith.constant 0 : index
    %124 = vector.load %arg3[%c0_55, %c0_56, %c0_57] : memref<9x8x8xf32, #tpu.memory_space<vmem>>, vector<1x8x8xf32>
    %125 = vector.shape_cast %124 : vector<1x8x8xf32> to vector<8x8xf32>
    %cst_58 = arith.constant dense<0.000000e+00> : vector<8x256xf32>
    %126 = tpu.matmul %125, %123, %cst_58 {dimension_numbers = #tpu.dot_dimension_numbers<[1], [0], [0], [1], [0, 0, 1, 1], [], []>} : vector<8x8xf32>, vector<8x256xf32>, vector<8x256xf32> -> vector<8x256xf32>
    %127 = arith.addf %116, %126 : vector<8x256xf32>
    %c16_i32_59 = arith.constant 16 : i32
    %128 = tpu.dynamic_rotate %115 by %c16_i32_59 dim 1 : vector<8x256xf32>, i32 -> vector<8x256xf32>
    %cst_60 = arith.constant 0.000000e+00 : f32
    %129 = vector.shape_cast %18 : vector<1x256xi1> to vector<1x256xi1>
    %130 = vector.broadcast %129 : vector<1x256xi1> to vector<8x256xi1>
    %131 = vector.broadcast %cst_60 : f32 to vector<8x256xf32>
    %132 = arith.select %130, %128, %131 : vector<8x256xi1>, vector<8x256xf32>
    %c1_61 = arith.constant 1 : index
    %c0_62 = arith.constant 0 : index
    %c0_63 = arith.constant 0 : index
    %133 = vector.load %arg3[%c1_61, %c0_62, %c0_63] : memref<9x8x8xf32, #tpu.memory_space<vmem>>, vector<1x8x8xf32>
    %134 = vector.shape_cast %133 : vector<1x8x8xf32> to vector<8x8xf32>
    %cst_64 = arith.constant dense<0.000000e+00> : vector<8x256xf32>
    %135 = tpu.matmul %134, %132, %cst_64 {dimension_numbers = #tpu.dot_dimension_numbers<[1], [0], [0], [1], [0, 0, 1, 1], [], []>} : vector<8x8xf32>, vector<8x256xf32>, vector<8x256xf32> -> vector<8x256xf32>
    %136 = arith.addf %127, %135 : vector<8x256xf32>
    %c15_i32_65 = arith.constant 15 : i32
    %137 = tpu.dynamic_rotate %115 by %c15_i32_65 dim 1 : vector<8x256xf32>, i32 -> vector<8x256xf32>
    %cst_66 = arith.constant 0.000000e+00 : f32
    %138 = vector.shape_cast %26 : vector<1x256xi1> to vector<1x256xi1>
    %139 = vector.broadcast %138 : vector<1x256xi1> to vector<8x256xi1>
    %140 = vector.broadcast %cst_66 : f32 to vector<8x256xf32>
    %141 = arith.select %139, %137, %140 : vector<8x256xi1>, vector<8x256xf32>
    %c2_67 = arith.constant 2 : index
    %c0_68 = arith.constant 0 : index
    %c0_69 = arith.constant 0 : index
    %142 = vector.load %arg3[%c2_67, %c0_68, %c0_69] : memref<9x8x8xf32, #tpu.memory_space<vmem>>, vector<1x8x8xf32>
    %143 = vector.shape_cast %142 : vector<1x8x8xf32> to vector<8x8xf32>
    %cst_70 = arith.constant dense<0.000000e+00> : vector<8x256xf32>
    %144 = tpu.matmul %143, %141, %cst_70 {dimension_numbers = #tpu.dot_dimension_numbers<[1], [0], [0], [1], [0, 0, 1, 1], [], []>} : vector<8x8xf32>, vector<8x256xf32>, vector<8x256xf32> -> vector<8x256xf32>
    %145 = arith.addf %136, %144 : vector<8x256xf32>
    %c1_i32_71 = arith.constant 1 : i32
    %146 = tpu.dynamic_rotate %115 by %c1_i32_71 dim 1 : vector<8x256xf32>, i32 -> vector<8x256xf32>
    %cst_72 = arith.constant 0.000000e+00 : f32
    %147 = vector.shape_cast %22 : vector<1x256xi1> to vector<1x256xi1>
    %148 = vector.broadcast %147 : vector<1x256xi1> to vector<8x256xi1>
    %149 = vector.broadcast %cst_72 : f32 to vector<8x256xf32>
    %150 = arith.select %148, %146, %149 : vector<8x256xi1>, vector<8x256xf32>
    %c3_73 = arith.constant 3 : index
    %c0_74 = arith.constant 0 : index
    %c0_75 = arith.constant 0 : index
    %151 = vector.load %arg3[%c3_73, %c0_74, %c0_75] : memref<9x8x8xf32, #tpu.memory_space<vmem>>, vector<1x8x8xf32>
    %152 = vector.shape_cast %151 : vector<1x8x8xf32> to vector<8x8xf32>
    %cst_76 = arith.constant dense<0.000000e+00> : vector<8x256xf32>
    %153 = tpu.matmul %152, %150, %cst_76 {dimension_numbers = #tpu.dot_dimension_numbers<[1], [0], [0], [1], [0, 0, 1, 1], [], []>} : vector<8x8xf32>, vector<8x256xf32>, vector<8x256xf32> -> vector<8x256xf32>
    %154 = arith.addf %117, %153 : vector<8x256xf32>
    %c4_77 = arith.constant 4 : index
    %c0_78 = arith.constant 0 : index
    %c0_79 = arith.constant 0 : index
    %155 = vector.load %arg3[%c4_77, %c0_78, %c0_79] : memref<9x8x8xf32, #tpu.memory_space<vmem>>, vector<1x8x8xf32>
    %156 = vector.shape_cast %155 : vector<1x8x8xf32> to vector<8x8xf32>
    %cst_80 = arith.constant dense<0.000000e+00> : vector<8x256xf32>
    %157 = tpu.matmul %156, %115, %cst_80 {dimension_numbers = #tpu.dot_dimension_numbers<[1], [0], [0], [1], [0, 0, 1, 1], [], []>} : vector<8x8xf32>, vector<8x256xf32>, vector<8x256xf32> -> vector<8x256xf32>
    %158 = arith.addf %154, %157 : vector<8x256xf32>
    %c255_i32_81 = arith.constant 255 : i32
    %159 = tpu.dynamic_rotate %115 by %c255_i32_81 dim 1 : vector<8x256xf32>, i32 -> vector<8x256xf32>
    %cst_82 = arith.constant 0.000000e+00 : f32
    %160 = vector.shape_cast %24 : vector<1x256xi1> to vector<1x256xi1>
    %161 = vector.broadcast %160 : vector<1x256xi1> to vector<8x256xi1>
    %162 = vector.broadcast %cst_82 : f32 to vector<8x256xf32>
    %163 = arith.select %161, %159, %162 : vector<8x256xi1>, vector<8x256xf32>
    %c5_83 = arith.constant 5 : index
    %c0_84 = arith.constant 0 : index
    %c0_85 = arith.constant 0 : index
    %164 = vector.load %arg3[%c5_83, %c0_84, %c0_85] : memref<9x8x8xf32, #tpu.memory_space<vmem>>, vector<1x8x8xf32>
    %165 = vector.shape_cast %164 : vector<1x8x8xf32> to vector<8x8xf32>
    %cst_86 = arith.constant dense<0.000000e+00> : vector<8x256xf32>
    %166 = tpu.matmul %165, %163, %cst_86 {dimension_numbers = #tpu.dot_dimension_numbers<[1], [0], [0], [1], [0, 0, 1, 1], [], []>} : vector<8x8xf32>, vector<8x256xf32>, vector<8x256xf32> -> vector<8x256xf32>
    %167 = arith.addf %158, %166 : vector<8x256xf32>
    %c241_i32_87 = arith.constant 241 : i32
    %168 = tpu.dynamic_rotate %115 by %c241_i32_87 dim 1 : vector<8x256xf32>, i32 -> vector<8x256xf32>
    %cst_88 = arith.constant 0.000000e+00 : f32
    %169 = vector.shape_cast %27 : vector<1x256xi1> to vector<1x256xi1>
    %170 = vector.broadcast %169 : vector<1x256xi1> to vector<8x256xi1>
    %171 = vector.broadcast %cst_88 : f32 to vector<8x256xf32>
    %172 = arith.select %170, %168, %171 : vector<8x256xi1>, vector<8x256xf32>
    %c6_89 = arith.constant 6 : index
    %c0_90 = arith.constant 0 : index
    %c0_91 = arith.constant 0 : index
    %173 = vector.load %arg3[%c6_89, %c0_90, %c0_91] : memref<9x8x8xf32, #tpu.memory_space<vmem>>, vector<1x8x8xf32>
    %174 = vector.shape_cast %173 : vector<1x8x8xf32> to vector<8x8xf32>
    %cst_92 = arith.constant dense<0.000000e+00> : vector<8x256xf32>
    %175 = tpu.matmul %174, %172, %cst_92 {dimension_numbers = #tpu.dot_dimension_numbers<[1], [0], [0], [1], [0, 0, 1, 1], [], []>} : vector<8x8xf32>, vector<8x256xf32>, vector<8x256xf32> -> vector<8x256xf32>
    %176 = arith.addf %118, %175 : vector<8x256xf32>
    %c240_i32_93 = arith.constant 240 : i32
    %177 = tpu.dynamic_rotate %115 by %c240_i32_93 dim 1 : vector<8x256xf32>, i32 -> vector<8x256xf32>
    %cst_94 = arith.constant 0.000000e+00 : f32
    %178 = vector.shape_cast %20 : vector<1x256xi1> to vector<1x256xi1>
    %179 = vector.broadcast %178 : vector<1x256xi1> to vector<8x256xi1>
    %180 = vector.broadcast %cst_94 : f32 to vector<8x256xf32>
    %181 = arith.select %179, %177, %180 : vector<8x256xi1>, vector<8x256xf32>
    %c7_95 = arith.constant 7 : index
    %c0_96 = arith.constant 0 : index
    %c0_97 = arith.constant 0 : index
    %182 = vector.load %arg3[%c7_95, %c0_96, %c0_97] : memref<9x8x8xf32, #tpu.memory_space<vmem>>, vector<1x8x8xf32>
    %183 = vector.shape_cast %182 : vector<1x8x8xf32> to vector<8x8xf32>
    %cst_98 = arith.constant dense<0.000000e+00> : vector<8x256xf32>
    %184 = tpu.matmul %183, %181, %cst_98 {dimension_numbers = #tpu.dot_dimension_numbers<[1], [0], [0], [1], [0, 0, 1, 1], [], []>} : vector<8x8xf32>, vector<8x256xf32>, vector<8x256xf32> -> vector<8x256xf32>
    %185 = arith.addf %176, %184 : vector<8x256xf32>
    %c239_i32_99 = arith.constant 239 : i32
    %186 = tpu.dynamic_rotate %115 by %c239_i32_99 dim 1 : vector<8x256xf32>, i32 -> vector<8x256xf32>
    %cst_100 = arith.constant 0.000000e+00 : f32
    %187 = vector.shape_cast %28 : vector<1x256xi1> to vector<1x256xi1>
    %188 = vector.broadcast %187 : vector<1x256xi1> to vector<8x256xi1>
    %189 = vector.broadcast %cst_100 : f32 to vector<8x256xf32>
    %190 = arith.select %188, %186, %189 : vector<8x256xi1>, vector<8x256xf32>
    %c8_101 = arith.constant 8 : index
    %c0_102 = arith.constant 0 : index
    %c0_103 = arith.constant 0 : index
    %191 = vector.load %arg3[%c8_101, %c0_102, %c0_103] : memref<9x8x8xf32, #tpu.memory_space<vmem>>, vector<1x8x8xf32>
    %192 = vector.shape_cast %191 : vector<1x8x8xf32> to vector<8x8xf32>
    %cst_104 = arith.constant dense<0.000000e+00> : vector<8x256xf32>
    %193 = tpu.matmul %192, %190, %cst_104 {dimension_numbers = #tpu.dot_dimension_numbers<[1], [0], [0], [1], [0, 0, 1, 1], [], []>} : vector<8x8xf32>, vector<8x256xf32>, vector<8x256xf32> -> vector<8x256xf32>
    %194 = arith.addf %185, %193 : vector<8x256xf32>
    %195 = arith.addf %145, %167 : vector<8x256xf32>
    %196 = arith.addf %195, %194 : vector<8x256xf32>
    %c0_105 = arith.constant 0 : index
    %c0_106 = arith.constant 0 : index
    %197 = vector.load %arg4[%c0_105, %c0_106] : memref<8x1xf32, #tpu.memory_space<vmem>>, vector<8x1xf32>
    %198 = vector.broadcast %197 : vector<8x1xf32> to vector<8x256xf32>
    %199 = arith.addf %196, %198 : vector<8x256xf32>
    %200 = arith.addf %199, %29 : vector<8x256xf32>
    %cst_107 = arith.constant 0.000000e+00 : f32
    %201 = vector.broadcast %cst_107 : f32 to vector<8x256xf32>
    %202 = arith.maximumf %200, %201 : vector<8x256xf32>
    %c0_108 = arith.constant 0 : index
    %c0_109 = arith.constant 0 : index
    %203 = vector.load %arg5[%c0_108, %c0_109] : memref<8x256xf32, #tpu.memory_space<vmem>>, vector<8x256xf32>
    tpu.vector_store %arg5[%c0_108, %c0_109], %202 {strides = array<i32>} : memref<8x256xf32, #tpu.memory_space<vmem>>, vector<8x256xf32>,
    return
  }
}

</mosaic_0001>

<llo_original>
// kernel: tpu_custom_call.1
$region0: #{tpu_custom_call.1}
  #allocation0 [shape = 'u32[]', space=smem, size = 0x4, offset = 0x4, fixed_abs, tag = 'smem constant byte address 0x4 - core index']
  #allocation1 [shape = 'u32[144,128]{1,0:T(1,128)}', space=vmem, size = 0x12000, scoped, tag = 'internal scratch']
  %s0 = inlined_call_operand.vmem [shape: f32[8,256], index: 0, kind: input, shape index: {}]
  %s1 = inlined_call_operand.vmem [shape: f32[9,8,8], index: 1, kind: input, shape index: {}]
  %s2 = inlined_call_operand.vmem [shape: f32[8,1], index: 2, kind: input, shape index: {}]
  %s3 = inlined_call_operand.vmem [shape: f32[9,8,8], index: 3, kind: input, shape index: {}]
  %s4 = inlined_call_operand.vmem [shape: f32[8,1], index: 4, kind: input, shape index: {}]
  %s5 = inlined_call_operand.hbm [shape: f32[8,256], index: 5, kind: output, shape index: {}]
  %s6 = sld [smem:[#allocation0]]
  $region30: #{tpu_custom_call.1} parent=0
    _
  %s8 = ssub.s32 1, %s6
  %s9 = scalar_select 0, %s8, %s6
  $region1: #{tpu_custom_call.1} parent=0
    #allocation2 [shape = 'u8[8192]{0}', space=vmem, size = 0x2000, scoped, tag = 'output window, operand 0, single buffered']
    #allocation3 [shape = 's32[1]{0}', space=sflag, size = 0x4, scoped, tag = 'scoped memory for tpu_custom_call.1']
    %10 = vsyncpa [#allocation3], 0
    // Predicated region
    $region2: #{tpu_custom_call.1} parent=1 // pred_check
      _
    $region3: #{tpu_custom_call.1} parent=1 // pred_check_branch
      %12 = sbr.rel (0) target = $region5
    $region4: #{tpu_custom_call.1} parent=1 // pred_region
      _
    $region5: #{tpu_custom_call.1} parent=1 // pred_fallthru
      _
    // Predicated region
    $region6: #{tpu_custom_call.1} parent=1 // pred_check
      _
    $region7: #{tpu_custom_call.1} parent=1 // pred_check_branch
      %14 = sbr.rel (0) target = $region9
    $region8: #{tpu_custom_call.1} parent=1 // pred_region
      _
    $region9: #{tpu_custom_call.1} parent=1 // pred_fallthru
      _
    // Predicated region
    $region10: #{tpu_custom_call.1} parent=1 // pred_check
      _
    $region11: #{tpu_custom_call.1} parent=1 // pred_check_branch
      %16 = sbr.rel (0) target = $region13
    $region12: #{tpu_custom_call.1} parent=1 // pred_region
      _
    $region13: #{tpu_custom_call.1} parent=1 // pred_fallthru
      _
    // Predicated region
    $region14: #{tpu_custom_call.1} parent=1 // pred_check
      _
    $region15: #{tpu_custom_call.1} parent=1 // pred_check_branch
      %18 = sbr.rel (0) target = $region17
    $region16: #{tpu_custom_call.1} parent=1 // pred_region
      _
    $region17: #{tpu_custom_call.1} parent=1 // pred_fallthru
      _
    // Predicated region
    $region18: #{tpu_custom_call.1} parent=1 // pred_check
      _
    $region19: #{tpu_custom_call.1} parent=1 // pred_check_branch
      %20 = sbr.rel (0) target = $region21
    $region20: #{tpu_custom_call.1} parent=1 // pred_region
      _
    $region21: #{tpu_custom_call.1} parent=1 // pred_fallthru
      _
    %v21 = vlaneseq
    %v22 = vand.u32 %v21, 127
    %v23 = vadd.s32 %v22, 128
    %vm24 = vcmp.lt.s32.totalorder %v22, 0
    %v25 = vsub.s32 0, %v22
    %v26 = vsel %vm24, %v25, %v22
    %v27 = vshrl.u32 %v26, 4
    %v28 = vand.u32 %v26, 15
    %v29 = vsub.s32 0, %v28
    %v30 = vsel %vm24, %v29, %v28
    %vm31 = vcmp.lt.s32.totalorder %v23, 0
    %v32 = vsub.s32 0, %v23
    %v33 = vsel %vm31, %v32, %v23
    %v34 = vshrl.u32 %v33, 4
    %v35 = vand.u32 %v33, 15
    %v36 = vsub.s32 0, %v35
    %v37 = vsel %vm31, %v36, %v35
    %vm38 = vcmp.ne.s32.totalorder %v30, 0
    %vm39 = vcmp.ne.s32.totalorder %v37, 0
    %vm40 = vcmp.lt.s32.totalorder %v30, 0
    %vm41 = vcmp.lt.s32.totalorder %v37, 0
    %vm42 = vmand %vm40, %vm38
    %vm43 = vmand %vm41, %vm39
    %v44 = vadd.s32 %v30, 16
    %v45 = vadd.s32 %v37, 16
    %v46 = vsel %vm42, %v44, %v30
    %v47 = vsel %vm43, %v45, %v37
    %vm48 = vcmp.ge.s32.totalorder %v22, 16
    %vm49 = vcmp.ge.s32.totalorder %v23, 16
    %vm50 = vcmp.lt.s32.totalorder %v22, 240
    %vm51 = vcmp.lt.s32.totalorder %v23, 240
    %vm52 = vcmp.ge.s32.totalorder %v46, 1
    %vm53 = vcmp.ge.s32.totalorder %v47, 1
    %vm54 = vcmp.le.s32.totalorder %v46, 14
    %vm55 = vcmp.le.s32.totalorder %v47, 14
    %vm56 = vmand %vm48, %vm52
    %vm57 = vmand %vm49, %vm53
    %vm58 = vmand %vm48, %vm54
    %vm59 = vmand %vm49, %vm55
    %vm60 = vmand %vm50, %vm52
    %vm61 = vmand %vm51, %vm53
    %vm62 = vmand %vm50, %vm54
    %vm63 = vmand %vm51, %vm55
    %v64 = vld [vmem:[%s0] sm:$0xff]
    %v65 = vld [vmem:[%s0 + $0x8] sm:$0xff]
    %66 = vrot.lane.b32.xlu0 %v64, 17
    %v67 = vpop.permute.xlu0 %66
    %68 = vrot.lane.b32.xlu0 %v65, 17
    %v69 = vpop.permute.xlu0 %68
    %vm70 = vcmp.lt.s32.totalorder %v22, 17
    %v71 = vsel %vm70, %v67, %v69
    %v72 = vsel %vm70, %v69, %v67
    %v73 = vsel %vm56, 1, 0
    %v74 = vsel %vm57, 1, 0
    %vm75 = vcmp.eq.s32.totalorder %v73, 1
    %vm76 = vcmp.eq.s32.totalorder %v74, 1
    %v77 = vsel %vm75, %v72, 0.0
    %v78 = vsel %vm76, %v71, 0.0
    %v79 = vld [vmem:[%s1] sm:$0xff]
    %80 = vrot.lane.b32.xlu0 %v64, 16
    %v81 = vpop.permute.xlu0 %80
    %82 = vrot.lane.b32.xlu0 %v65, 16
    %v83 = vpop.permute.xlu0 %82
    %vm84 = vcmp.lt.s32.totalorder %v22, 16
    %v85 = vsel %vm84, %v81, %v83
    %v86 = vsel %vm84, %v83, %v81
    %v87 = vsel %vm48, 1, 0
    %v88 = vsel %vm49, 1, 0
    %vm89 = vcmp.eq.s32.totalorder %v87, 1
    %vm90 = vcmp.eq.s32.totalorder %v88, 1
    %v91 = vsel %vm89, %v86, 0.0
    %v92 = vsel %vm90, %v85, 0.0
    %s93 = scalar_lea.vmem %s1, 8
    %v94 = vld [vmem:[%s93] sm:$0xff]
    %vm95 = vcmask 64512
    %v97 = vsel %vm95, %v94, 0
    %99 = vmatprep.subr.mxu0 %v92
    %100 = vmatpush1.msra.mxu0 %v91
    %101 = vmatprep.subr.mxu0 0.0
    %102 = vmatpush1.msra.mxu0 0.0
    %103 = vmatprep.subr.mxu0 0.0
    %104 = vmatpush1.msra.mxu0 0.0
    %105 = vmatprep.subr.mxu0 0.0
    %106 = vmatpush1.msra.mxu0 0.0
    %107 = vmatprep.subr.mxu0 0.0
    %108 = vmatpush1.msra.mxu0 0.0
    %109 = vmatprep.subr.mxu0 0.0
    %110 = vmatpush1.msra.mxu0 0.0
    %111 = vmatprep.subr.mxu0 0.0
    %112 = vmatpush1.msra.mxu0 0.0
    %113 = vmatprep.subr.mxu0 0.0
    %114 = vmatpush1.msra.mxu0 0.0
    %115 = vmatprep.subr.mxu0 0.0
    %116 = vmatpush1.msra.mxu0 0.0
    %117 = vmatprep.subr.mxu0 0.0
    %118 = vmatpush1.msra.mxu0 0.0
    %119 = vmatprep.subr.mxu0 0.0
    %120 = vmatpush1.msra.mxu0 0.0
    %121 = vmatprep.subr.mxu0 0.0
    %122 = vmatpush1.msra.mxu0 0.0
    %123 = vmatprep.subr.mxu0 0.0
    %124 = vmatpush1.msra.mxu0 0.0
    %125 = vmatprep.subr.mxu0 0.0
    %126 = vmatpush1.msra.mxu0 0.0
    %127 = vmatprep.subr.mxu0 0.0
    %128 = vmatpush1.msra.mxu0 0.0
    %129 = vmatprep.subr.mxu0 0.0
    %130 = vmatpush1.msra.mxu0 0.0
    %131 = vmatprep.subr.mxu0 0.0
    %132 = vmatpush1.msra.mxu0 0.0
    %133 = vmatprep.subr.mxu0 0.0
    %134 = vmatpush1.msra.mxu0 0.0
    %135 = vmatprep.subr.mxu0 0.0
    %136 = vmatpush1.msra.mxu0 0.0
    %137 = vmatprep.subr.mxu0 0.0
    %138 = vmatpush1.msra.mxu0 0.0
    %139 = vmatprep.subr.mxu0 0.0
    %140 = vmatpush1.msra.mxu0 0.0
    %141 = vmatprep.subr.mxu0 0.0
    %142 = vmatpush1.msra.mxu0 0.0
    %143 = vmatprep.subr.mxu0 0.0
    %144 = vmatpush1.msra.mxu0 0.0
    %145 = vmatprep.subr.mxu0 0.0
    %146 = vmatpush1.msra.mxu0 0.0
    %147 = vmatprep.subr.mxu0 0.0
    %148 = vmatpush1.msra.mxu0 0.0
    %149 = vmatprep.subr.mxu0 0.0
    %150 = vmatpush1.msra.mxu0 0.0
    %151 = vmatprep.subr.mxu0 0.0
    %152 = vmatpush1.msra.mxu0 0.0
    %153 = vmatprep.subr.mxu0 0.0
    %154 = vmatpush1.msra.mxu0 0.0
    %155 = vmatprep.subr.mxu0 0.0
    %156 = vmatpush1.msra.mxu0 0.0
    %157 = vmatprep.subr.mxu0 0.0
    %158 = vmatpush1.msra.mxu0 0.0
    %159 = vmatprep.subr.mxu0 0.0
    %160 = vmatpush1.msra.mxu0 0.0
    %161 = vmatprep.subr.mxu0 0.0
    %162 = vmatpush1.msra.mxu0 0.0
    %163 = vmatprep.mubr.f32.mxu0 0.0
    %164 = vmatmul.mubr.f32.gmra.mrb[0].mxu0 %v97
    %v165 = vpop.f32.mrb[0].mxu0
    %v166 = vadd.f32 0.0, %v165
    %v167 = vpop.f32.mrb[0].mxu0
    %v168 = vadd.f32 0.0, %v167
    %169 = vdwg.mxu0
    %v171 = vsel %vm95, %v79, 0
    %173 = vmatprep.subr.mxu0 %v78
    %174 = vmatpush1.msra.mxu0 %v77
    %175 = vmatprep.subr.mxu0 0.0
    %176 = vmatpush1.msra.mxu0 0.0
    %177 = vmatprep.subr.mxu0 0.0
    %178 = vmatpush1.msra.mxu0 0.0
    %179 = vmatprep.subr.mxu0 0.0
    %180 = vmatpush1.msra.mxu0 0.0
    %181 = vmatprep.subr.mxu0 0.0
    %182 = vmatpush1.msra.mxu0 0.0
    %183 = vmatprep.subr.mxu0 0.0
    %184 = vmatpush1.msra.mxu0 0.0
    %185 = vmatprep.subr.mxu0 0.0
    %186 = vmatpush1.msra.mxu0 0.0
    %187 = vmatprep.subr.mxu0 0.0
    %188 = vmatpush1.msra.mxu0 0.0
    %189 = vmatprep.subr.mxu0 0.0
    %190 = vmatpush1.msra.mxu0 0.0
    %191 = vmatprep.subr.mxu0 0.0
    %192 = vmatpush1.msra.mxu0 0.0
    %193 = vmatprep.subr.mxu0 0.0
    %194 = vmatpush1.msra.mxu0 0.0
    %195 = vmatprep.subr.mxu0 0.0
    %196 = vmatpush1.msra.mxu0 0.0
    %197 = vmatprep.subr.mxu0 0.0
    %198 = vmatpush1.msra.mxu0 0.0
    %199 = vmatprep.subr.mxu0 0.0
    %200 = vmatpush1.msra.mxu0 0.0
    %201 = vmatprep.subr.mxu0 0.0
    %202 = vmatpush1.msra.mxu0 0.0
    %203 = vmatprep.subr.mxu0 0.0
    %204 = vmatpush1.msra.mxu0 0.0
    %205 = vmatprep.subr.mxu0 0.0
    %206 = vmatpush1.msra.mxu0 0.0
    %207 = vmatprep.subr.mxu0 0.0
    %208 = vmatpush1.msra.mxu0 0.0
    %209 = vmatprep.subr.mxu0 0.0
    %210 = vmatpush1.msra.mxu0 0.0
    %211 = vmatprep.subr.mxu0 0.0
    %212 = vmatpush1.msra.mxu0 0.0
    %213 = vmatprep.subr.mxu0 0.0
    %214 = vmatpush1.msra.mxu0 0.0
    %215 = vmatprep.subr.mxu0 0.0
    %216 = vmatpush1.msra.mxu0 0.0
    %217 = vmatprep.subr.mxu0 0.0
    %218 = vmatpush1.msra.mxu0 0.0
    %219 = vmatprep.subr.mxu0 0.0
    %220 = vmatpush1.msra.mxu0 0.0
    %221 = vmatprep.subr.mxu0 0.0
    %222 = vmatpush1.msra.mxu0 0.0
    %223 = vmatprep.subr.mxu0 0.0
    %224 = vmatpush1.msra.mxu0 0.0
    %225 = vmatprep.subr.mxu0 0.0
    %226 = vmatpush1.msra.mxu0 0.0
    %227 = vmatprep.subr.mxu0 0.0
    %228 = vmatpush1.msra.mxu0 0.0
    %229 = vmatprep.subr.mxu0 0.0
    %230 = vmatpush1.msra.mxu0 0.0
    %231 = vmatprep.subr.mxu0 0.0
    %232 = vmatpush1.msra.mxu0 0.0
    %233 = vmatprep.subr.mxu0 0.0
    %234 = vmatpush1.msra.mxu0 0.0
    %235 = vmatprep.subr.mxu0 0.0
    %236 = vmatpush1.msra.mxu0 0.0
    %237 = vmatprep.mubr.f32.mxu0 0.0
    %238 = vmatmul.mubr.f32.gmra.mrb[0].mxu0 %v171
    %v239 = vpop.f32.mrb[0].mxu0
    %v240 = vadd.f32 %v166, %v239
    %v241 = vpop.f32.mrb[0].mxu0
    %v242 = vadd.f32 %v168, %v241
    %243 = vdwg.mxu0
    %244 = vrot.lane.b32.xlu0 %v64, 15
    %v245 = vpop.permute.xlu0 %244
    %246 = vrot.lane.b32.xlu0 %v65, 15
    %v247 = vpop.permute.xlu0 %246
    %vm248 = vcmp.lt.s32.totalorder %v22, 15
    %v249 = vsel %vm248, %v245, %v247
    %v250 = vsel %vm248, %v247, %v245
    %v251 = vsel %vm58, 1, 0
    %v252 = vsel %vm59, 1, 0
    %vm253 = vcmp.eq.s32.totalorder %v251, 1
    %vm254 = vcmp.eq.s32.totalorder %v252, 1
    %v255 = vsel %vm253, %v250, 0.0
    %v256 = vsel %vm254, %v249, 0.0
    %s257 = scalar_lea.vmem %s1, 16
    %v258 = vld [vmem:[%s257] sm:$0xff]
    %v260 = vsel %vm95, %v258, 0
    %262 = vmatprep.subr.mxu0 %v256
    %263 = vmatpush1.msra.mxu0 %v255
    %264 = vmatprep.subr.mxu0 0.0
    %265 = vmatpush1.msra.mxu0 0.0
    %266 = vmatprep.subr.mxu0 0.0
    %267 = vmatpush1.msra.mxu0 0.0
    %268 = vmatprep.subr.mxu0 0.0
    %269 = vmatpush1.msra.mxu0 0.0
    %270 = vmatprep.subr.mxu0 0.0
    %271 = vmatpush1.msra.mxu0 0.0
    %272 = vmatprep.subr.mxu0 0.0
    %273 = vmatpush1.msra.mxu0 0.0
    %274 = vmatprep.subr.mxu0 0.0
    %275 = vmatpush1.msra.mxu0 0.0
    %276 = vmatprep.subr.mxu0 0.0
    %277 = vmatpush1.msra.mxu0 0.0
    %278 = vmatprep.subr.mxu0 0.0
    %279 = vmatpush1.msra.mxu0 0.0
    %280 = vmatprep.subr.mxu0 0.0
    %281 = vmatpush1.msra.mxu0 0.0
    %282 = vmatprep.subr.mxu0 0.0
    %283 = vmatpush1.msra.mxu0 0.0
    %284 = vmatprep.subr.mxu0 0.0
    %285 = vmatpush1.msra.mxu0 0.0
    %286 = vmatprep.subr.mxu0 0.0
    %287 = vmatpush1.msra.mxu0 0.0
    %288 = vmatprep.subr.mxu0 0.0
    %289 = vmatpush1.msra.mxu0 0.0
    %290 = vmatprep.subr.mxu0 0.0
    %291 = vmatpush1.msra.mxu0 0.0
    %292 = vmatprep.subr.mxu0 0.0
    %293 = vmatpush1.msra.mxu0 0.0
    %294 = vmatprep.subr.mxu0 0.0
    %295 = vmatpush1.msra.mxu0 0.0
    %296 = vmatprep.subr.mxu0 0.0
    %297 = vmatpush1.msra.mxu0 0.0
    %298 = vmatprep.subr.mxu0 0.0
    %299 = vmatpush1.msra.mxu0 0.0
    %300 = vmatprep.subr.mxu0 0.0
    %301 = vmatpush1.msra.mxu0 0.0
    %302 = vmatprep.subr.mxu0 0.0
    %303 = vmatpush1.msra.mxu0 0.0
    %304 = vmatprep.subr.mxu0 0.0
    %305 = vmatpush1.msra.mxu0 0.0
    %306 = vmatprep.subr.mxu0 0.0
    %307 = vmatpush1.msra.mxu0 0.0
    %308 = vmatprep.subr.mxu0 0.0
    %309 = vmatpush1.msra.mxu0 0.0
    %310 = vmatprep.subr.mxu0 0.0
    %311 = vmatpush1.msra.mxu0 0.0
    %312 = vmatprep.subr.mxu0 0.0
    %313 = vmatpush1.msra.mxu0 0.0
    %314 = vmatprep.subr.mxu0 0.0
    %315 = vmatpush1.msra.mxu0 0.0
    %316 = vmatprep.subr.mxu0 0.0
    %317 = vmatpush1.msra.mxu0 0.0
    %318 = vmatprep.subr.mxu0 0.0
    %319 = vmatpush1.msra.mxu0 0.0
    %320 = vmatprep.subr.mxu0 0.0
    %321 = vmatpush1.msra.mxu0 0.0
    %322 = vmatprep.subr.mxu0 0.0
    %323 = vmatpush1.msra.mxu0 0.0
    %324 = vmatprep.subr.mxu0 0.0
    %325 = vmatpush1.msra.mxu0 0.0
    %326 = vmatprep.mubr.f32.mxu0 0.0
    %327 = vmatmul.mubr.f32.gmra.mrb[0].mxu0 %v260
    %v328 = vpop.f32.mrb[0].mxu0
    %v329 = vadd.f32 0.0, %v328
    %v330 = vpop.f32.mrb[0].mxu0
    %v331 = vadd.f32 0.0, %v330
    %332 = vdwg.mxu0
    %v333 = vadd.f32 %v240, %v329
    %v334 = vadd.f32 %v242, %v331
    %335 = vrot.lane.b32.xlu0 %v64, 1
    %v336 = vpop.permute.xlu0 %335
    %337 = vrot.lane.b32.xlu0 %v65, 1
    %v338 = vpop.permute.xlu0 %337
    %vm339 = vcmp.lt.s32.totalorder %v22, 1
    %v340 = vsel %vm339, %v336, %v338
    %v341 = vsel %vm339, %v338, %v336
    %v342 = vsel %vm52, 1, 0
    %v343 = vsel %vm53, 1, 0
    %vm344 = vcmp.eq.s32.totalorder %v342, 1
    %vm345 = vcmp.eq.s32.totalorder %v343, 1
    %v346 = vsel %vm344, %v341, 0.0
    %v347 = vsel %vm345, %v340, 0.0
    %s348 = scalar_lea.vmem %s1, 24
    %v349 = vld [vmem:[%s348] sm:$0xff]
    %s350 = scalar_lea.vmem %s1, 32
    %v351 = vld [vmem:[%s350] sm:$0xff]
    %v353 = vsel %vm95, %v351, 0
    %355 = vmatprep.subr.mxu0 %v65
    %356 = vmatpush1.msra.mxu0 %v64
    %357 = vmatprep.subr.mxu0 0.0
    %358 = vmatpush1.msra.mxu0 0.0
    %359 = vmatprep.subr.mxu0 0.0
    %360 = vmatpush1.msra.mxu0 0.0
    %361 = vmatprep.subr.mxu0 0.0
    %362 = vmatpush1.msra.mxu0 0.0
    %363 = vmatprep.subr.mxu0 0.0
    %364 = vmatpush1.msra.mxu0 0.0
    %365 = vmatprep.subr.mxu0 0.0
    %366 = vmatpush1.msra.mxu0 0.0
    %367 = vmatprep.subr.mxu0 0.0
    %368 = vmatpush1.msra.mxu0 0.0
    %369 = vmatprep.subr.mxu0 0.0
    %370 = vmatpush1.msra.mxu0 0.0
    %371 = vmatprep.subr.mxu0 0.0
    %372 = vmatpush1.msra.mxu0 0.0
    %373 = vmatprep.subr.mxu0 0.0
    %374 = vmatpush1.msra.mxu0 0.0
    %375 = vmatprep.subr.mxu0 0.0
    %376 = vmatpush1.msra.mxu0 0.0
    %377 = vmatprep.subr.mxu0 0.0
    %378 = vmatpush1.msra.mxu0 0.0
    %379 = vmatprep.subr.mxu0 0.0
    %380 = vmatpush1.msra.mxu0 0.0
    %381 = vmatprep.subr.mxu0 0.0
    %382 = vmatpush1.msra.mxu0 0.0
    %383 = vmatprep.subr.mxu0 0.0
    %384 = vmatpush1.msra.mxu0 0.0
    %385 = vmatprep.subr.mxu0 0.0
    %386 = vmatpush1.msra.mxu0 0.0
    %387 = vmatprep.subr.mxu0 0.0
    %388 = vmatpush1.msra.mxu0 0.0
    %389 = vmatprep.subr.mxu0 0.0
    %390 = vmatpush1.msra.mxu0 0.0
    %391 = vmatprep.subr.mxu0 0.0
    %392 = vmatpush1.msra.mxu0 0.0
    %393 = vmatprep.subr.mxu0 0.0
    %394 = vmatpush1.msra.mxu0 0.0
    %395 = vmatprep.subr.mxu0 0.0
    %396 = vmatpush1.msra.mxu0 0.0
    %397 = vmatprep.subr.mxu0 0.0
    %398 = vmatpush1.msra.mxu0 0.0
    %399 = vmatprep.subr.mxu0 0.0
    %400 = vmatpush1.msra.mxu0 0.0
    %401 = vmatprep.subr.mxu0 0.0
    %402 = vmatpush1.msra.mxu0 0.0
    %403 = vmatprep.subr.mxu0 0.0
    %404 = vmatpush1.msra.mxu0 0.0
    %405 = vmatprep.subr.mxu0 0.0
    %406 = vmatpush1.msra.mxu0 0.0
    %407 = vmatprep.subr.mxu0 0.0
    %408 = vmatpush1.msra.mxu0 0.0
    %409 = vmatprep.subr.mxu0 0.0
    %410 = vmatpush1.msra.mxu0 0.0
    %411 = vmatprep.subr.mxu0 0.0
    %412 = vmatpush1.msra.mxu0 0.0
    %413 = vmatprep.subr.mxu0 0.0
    %414 = vmatpush1.msra.mxu0 0.0
    %415 = vmatprep.subr.mxu0 0.0
    %416 = vmatpush1.msra.mxu0 0.0
    %417 = vmatprep.subr.mxu0 0.0
    %418 = vmatpush1.msra.mxu0 0.0
    %419 = vmatprep.mubr.f32.mxu0 0.0
    %420 = vmatmul.mubr.f32.gmra.mrb[0].mxu0 %v353
    %v421 = vpop.f32.mrb[0].mxu0
    %v422 = vadd.f32 0.0, %v421
    %v423 = vpop.f32.mrb[0].mxu0
    %v424 = vadd.f32 0.0, %v423
    %425 = vdwg.mxu0
    %v427 = vsel %vm95, %v349, 0
    %429 = vmatprep.subr.mxu0 %v347
    %430 = vmatpush1.msra.mxu0 %v346
    %431 = vmatprep.subr.mxu0 0.0
    %432 = vmatpush1.msra.mxu0 0.0
    %433 = vmatprep.subr.mxu0 0.0
    %434 = vmatpush1.msra.mxu0 0.0
    %435 = vmatprep.subr.mxu0 0.0
    %436 = vmatpush1.msra.mxu0 0.0
    %437 = vmatprep.subr.mxu0 0.0
    %438 = vmatpush1.msra.mxu0 0.0
    %439 = vmatprep.subr.mxu0 0.0
    %440 = vmatpush1.msra.mxu0 0.0
    %441 = vmatprep.subr.mxu0 0.0
    %442 = vmatpush1.msra.mxu0 0.0
    %443 = vmatprep.subr.mxu0 0.0
    %444 = vmatpush1.msra.mxu0 0.0
    %445 = vmatprep.subr.mxu0 0.0
    %446 = vmatpush1.msra.mxu0 0.0
    %447 = vmatprep.subr.mxu0 0.0
    %448 = vmatpush1.msra.mxu0 0.0
    %449 = vmatprep.subr.mxu0 0.0
    %450 = vmatpush1.msra.mxu0 0.0
    %451 = vmatprep.subr.mxu0 0.0
    %452 = vmatpush1.msra.mxu0 0.0
    %453 = vmatprep.subr.mxu0 0.0
    %454 = vmatpush1.msra.mxu0 0.0
    %455 = vmatprep.subr.mxu0 0.0
    %456 = vmatpush1.msra.mxu0 0.0
    %457 = vmatprep.subr.mxu0 0.0
    %458 = vmatpush1.msra.mxu0 0.0
    %459 = vmatprep.subr.mxu0 0.0
    %460 = vmatpush1.msra.mxu0 0.0
    %461 = vmatprep.subr.mxu0 0.0
    %462 = vmatpush1.msra.mxu0 0.0
    %463 = vmatprep.subr.mxu0 0.0
    %464 = vmatpush1.msra.mxu0 0.0
    %465 = vmatprep.subr.mxu0 0.0
    %466 = vmatpush1.msra.mxu0 0.0
    %467 = vmatprep.subr.mxu0 0.0
    %468 = vmatpush1.msra.mxu0 0.0
    %469 = vmatprep.subr.mxu0 0.0
    %470 = vmatpush1.msra.mxu0 0.0
    %471 = vmatprep.subr.mxu0 0.0
    %472 = vmatpush1.msra.mxu0 0.0
    %473 = vmatprep.subr.mxu0 0.0
    %474 = vmatpush1.msra.mxu0 0.0
    %475 = vmatprep.subr.mxu0 0.0
    %476 = vmatpush1.msra.mxu0 0.0
    %477 = vmatprep.subr.mxu0 0.0
    %478 = vmatpush1.msra.mxu0 0.0
    %479 = vmatprep.subr.mxu0 0.0
    %480 = vmatpush1.msra.mxu0 0.0
    %481 = vmatprep.subr.mxu0 0.0
    %482 = vmatpush1.msra.mxu0 0.0
    %483 = vmatprep.subr.mxu0 0.0
    %484 = vmatpush1.msra.mxu0 0.0
    %485 = vmatprep.subr.mxu0 0.0
    %486 = vmatpush1.msra.mxu0 0.0
    %487 = vmatprep.subr.mxu0 0.0
    %488 = vmatpush1.msra.mxu0 0.0
    %489 = vmatprep.subr.mxu0 0.0
    %490 = vmatpush1.msra.mxu0 0.0
    %491 = vmatprep.subr.mxu0 0.0
    %492 = vmatpush1.msra.mxu0 0.0
    %493 = vmatprep.mubr.f32.mxu0 0.0
    %494 = vmatmul.mubr.f32.gmra.mrb[0].mxu0 %v427
    %v495 = vpop.f32.mrb[0].mxu0
    %v496 = vadd.f32 %v422, %v495
    %v497 = vpop.f32.mrb[0].mxu0
    %v498 = vadd.f32 %v424, %v497
    %499 = vdwg.mxu0
    %500 = vrot.lane.b32.xlu0 %v64, 127
    %v501 = vpop.permute.xlu0 %500
    %502 = vrot.lane.b32.xlu0 %v65, 127
    %v503 = vpop.permute.xlu0 %502
    %vm504 = vcmp.lt.s32.totalorder %v22, 127
    %v505 = vsel %vm504, %v501, %v503
    %v506 = vsel %vm504, %v503, %v501
    %v507 = vsel %vm54, 1, 0
    %v508 = vsel %vm55, 1, 0
    %vm509 = vcmp.eq.s32.totalorder %v507, 1
    %vm510 = vcmp.eq.s32.totalorder %v508, 1
    %v511 = vsel %vm509, %v505, 0.0
    %v512 = vsel %vm510, %v506, 0.0
    %s513 = scalar_lea.vmem %s1, 40
    %v514 = vld [vmem:[%s513] sm:$0xff]
    %v516 = vsel %vm95, %v514, 0
    %518 = vmatprep.subr.mxu0 %v512
    %519 = vmatpush1.msra.mxu0 %v511
    %520 = vmatprep.subr.mxu0 0.0
    %521 = vmatpush1.msra.mxu0 0.0
    %522 = vmatprep.subr.mxu0 0.0
    %523 = vmatpush1.msra.mxu0 0.0
    %524 = vmatprep.subr.mxu0 0.0
    %525 = vmatpush1.msra.mxu0 0.0
    %526 = vmatprep.subr.mxu0 0.0
    %527 = vmatpush1.msra.mxu0 0.0
    %528 = vmatprep.subr.mxu0 0.0
    %529 = vmatpush1.msra.mxu0 0.0
    %530 = vmatprep.subr.mxu0 0.0
    %531 = vmatpush1.msra.mxu0 0.0
    %532 = vmatprep.subr.mxu0 0.0
    %533 = vmatpush1.msra.mxu0 0.0
    %534 = vmatprep.subr.mxu0 0.0
    %535 = vmatpush1.msra.mxu0 0.0
    %536 = vmatprep.subr.mxu0 0.0
    %537 = vmatpush1.msra.mxu0 0.0
    %538 = vmatprep.subr.mxu0 0.0
    %539 = vmatpush1.msra.mxu0 0.0
    %540 = vmatprep.subr.mxu0 0.0
    %541 = vmatpush1.msra.mxu0 0.0
    %542 = vmatprep.subr.mxu0 0.0
    %543 = vmatpush1.msra.mxu0 0.0
    %544 = vmatprep.subr.mxu0 0.0
    %545 = vmatpush1.msra.mxu0 0.0
    %546 = vmatprep.subr.mxu0 0.0
    %547 = vmatpush1.msra.mxu0 0.0
    %548 = vmatprep.subr.mxu0 0.0
    %549 = vmatpush1.msra.mxu0 0.0
    %550 = vmatprep.subr.mxu0 0.0
    %551 = vmatpush1.msra.mxu0 0.0
    %552 = vmatprep.subr.mxu0 0.0
    %553 = vmatpush1.msra.mxu0 0.0
    %554 = vmatprep.subr.mxu0 0.0
    %555 = vmatpush1.msra.mxu0 0.0
    %556 = vmatprep.subr.mxu0 0.0
    %557 = vmatpush1.msra.mxu0 0.0
    %558 = vmatprep.subr.mxu0 0.0
    %559 = vmatpush1.msra.mxu0 0.0
    %560 = vmatprep.subr.mxu0 0.0
    %561 = vmatpush1.msra.mxu0 0.0
    %562 = vmatprep.subr.mxu0 0.0
    %563 = vmatpush1.msra.mxu0 0.0
    %564 = vmatprep.subr.mxu0 0.0
    %565 = vmatpush1.msra.mxu0 0.0
    %566 = vmatprep.subr.mxu0 0.0
    %567 = vmatpush1.msra.mxu0 0.0
    %568 = vmatprep.subr.mxu0 0.0
    %569 = vmatpush1.msra.mxu0 0.0
    %570 = vmatprep.subr.mxu0 0.0
    %571 = vmatpush1.msra.mxu0 0.0
    %572 = vmatprep.subr.mxu0 0.0
    %573 = vmatpush1.msra.mxu0 0.0
    %574 = vmatprep.subr.mxu0 0.0
    %575 = vmatpush1.msra.mxu0 0.0
    %576 = vmatprep.subr.mxu0 0.0
    %577 = vmatpush1.msra.mxu0 0.0
    %578 = vmatprep.subr.mxu0 0.0
    %579 = vmatpush1.msra.mxu0 0.0
    %580 = vmatprep.subr.mxu0 0.0
    %581 = vmatpush1.msra.mxu0 0.0
    %582 = vmatprep.mubr.f32.mxu0 0.0
    %583 = vmatmul.mubr.f32.gmra.mrb[0].mxu0 %v516
    %v584 = vpop.f32.mrb[0].mxu0
    %v585 = vadd.f32 0.0, %v584
    %v586 = vpop.f32.mrb[0].mxu0
    %v587 = vadd.f32 0.0, %v586
    %588 = vdwg.mxu0
    %v589 = vadd.f32 %v496, %v585
    %v590 = vadd.f32 %v498, %v587
    %591 = vrot.lane.b32.xlu0 %v64, 113
    %v592 = vpop.permute.xlu0 %591
    %593 = vrot.lane.b32.xlu0 %v65, 113
    %v594 = vpop.permute.xlu0 %593
    %vm595 = vcmp.lt.s32.totalorder %v22, 113
    %v596 = vsel %vm595, %v592, %v594
    %v597 = vsel %vm595, %v594, %v592
    %v598 = vsel %vm60, 1, 0
    %v599 = vsel %vm61, 1, 0
    %vm600 = vcmp.eq.s32.totalorder %v598, 1
    %vm601 = vcmp.eq.s32.totalorder %v599, 1
    %v602 = vsel %vm600, %v596, 0.0
    %v603 = vsel %vm601, %v597, 0.0
    %s604 = scalar_lea.vmem %s1, 48
    %v605 = vld [vmem:[%s604] sm:$0xff]
    %606 = vrot.lane.b32.xlu0 %v64, 112
    %v607 = vpop.permute.xlu0 %606
    %608 = vrot.lane.b32.xlu0 %v65, 112
    %v609 = vpop.permute.xlu0 %608
    %vm610 = vcmp.lt.s32.totalorder %v22, 112
    %v611 = vsel %vm610, %v607, %v609
    %v612 = vsel %vm610, %v609, %v607
    %v613 = vsel %vm50, 1, 0
    %v614 = vsel %vm51, 1, 0
    %vm615 = vcmp.eq.s32.totalorder %v613, 1
    %vm616 = vcmp.eq.s32.totalorder %v614, 1
    %v617 = vsel %vm615, %v611, 0.0
    %v618 = vsel %vm616, %v612, 0.0
    %s619 = scalar_lea.vmem %s1, 56
    %v620 = vld [vmem:[%s619] sm:$0xff]
    %v622 = vsel %vm95, %v620, 0
    %624 = vmatprep.subr.mxu0 %v618
    %625 = vmatpush1.msra.mxu0 %v617
    %626 = vmatprep.subr.mxu0 0.0
    %627 = vmatpush1.msra.mxu0 0.0
    %628 = vmatprep.subr.mxu0 0.0
    %629 = vmatpush1.msra.mxu0 0.0
    %630 = vmatprep.subr.mxu0 0.0
    %631 = vmatpush1.msra.mxu0 0.0
    %632 = vmatprep.subr.mxu0 0.0
    %633 = vmatpush1.msra.mxu0 0.0
    %634 = vmatprep.subr.mxu0 0.0
    %635 = vmatpush1.msra.mxu0 0.0
    %636 = vmatprep.subr.mxu0 0.0
    %637 = vmatpush1.msra.mxu0 0.0
    %638 = vmatprep.subr.mxu0 0.0
    %639 = vmatpush1.msra.mxu0 0.0
    %640 = vmatprep.subr.mxu0 0.0
    %641 = vmatpush1.msra.mxu0 0.0
    %642 = vmatprep.subr.mxu0 0.0
    %643 = vmatpush1.msra.mxu0 0.0
    %644 = vmatprep.subr.mxu0 0.0
    %645 = vmatpush1.msra.mxu0 0.0
    %646 = vmatprep.subr.mxu0 0.0
    %647 = vmatpush1.msra.mxu0 0.0
    %648 = vmatprep.subr.mxu0 0.0
    %649 = vmatpush1.msra.mxu0 0.0
    %650 = vmatprep.subr.mxu0 0.0
    %651 = vmatpush1.msra.mxu0 0.0
    %652 = vmatprep.subr.mxu0 0.0
    %653 = vmatpush1.msra.mxu0 0.0
    %654 = vmatprep.subr.mxu0 0.0
    %655 = vmatpush1.msra.mxu0 0.0
    %656 = vmatprep.subr.mxu0 0.0
    %657 = vmatpush1.msra.mxu0 0.0
    %658 = vmatprep.subr.mxu0 0.0
    %659 = vmatpush1.msra.mxu0 0.0
    %660 = vmatprep.subr.mxu0 0.0
    %661 = vmatpush1.msra.mxu0 0.0
    %662 = vmatprep.subr.mxu0 0.0
    %663 = vmatpush1.msra.mxu0 0.0
    %664 = vmatprep.subr.mxu0 0.0
    %665 = vmatpush1.msra.mxu0 0.0
    %666 = vmatprep.subr.mxu0 0.0
    %667 = vmatpush1.msra.mxu0 0.0
    %668 = vmatprep.subr.mxu0 0.0
    %669 = vmatpush1.msra.mxu0 0.0
    %670 = vmatprep.subr.mxu0 0.0
    %671 = vmatpush1.msra.mxu0 0.0
    %672 = vmatprep.subr.mxu0 0.0
    %673 = vmatpush1.msra.mxu0 0.0
    %674 = vmatprep.subr.mxu0 0.0
    %675 = vmatpush1.msra.mxu0 0.0
    %676 = vmatprep.subr.mxu0 0.0
    %677 = vmatpush1.msra.mxu0 0.0
    %678 = vmatprep.subr.mxu0 0.0
    %679 = vmatpush1.msra.mxu0 0.0
    %680 = vmatprep.subr.mxu0 0.0
    %681 = vmatpush1.msra.mxu0 0.0
    %682 = vmatprep.subr.mxu0 0.0
    %683 = vmatpush1.msra.mxu0 0.0
    %684 = vmatprep.subr.mxu0 0.0
    %685 = vmatpush1.msra.mxu0 0.0
    %686 = vmatprep.subr.mxu0 0.0
    %687 = vmatpush1.msra.mxu0 0.0
    %688 = vmatprep.mubr.f32.mxu0 0.0
    %689 = vmatmul.mubr.f32.gmra.mrb[0].mxu0 %v622
    %v690 = vpop.f32.mrb[0].mxu0
    %v691 = vadd.f32 0.0, %v690
    %v692 = vpop.f32.mrb[0].mxu0
    %v693 = vadd.f32 0.0, %v692
    %694 = vdwg.mxu0
    %v696 = vsel %vm95, %v605, 0
    %698 = vmatprep.subr.mxu0 %v603
    %699 = vmatpush1.msra.mxu0 %v602
    %700 = vmatprep.subr.mxu0 0.0
    %701 = vmatpush1.msra.mxu0 0.0
    %702 = vmatprep.subr.mxu0 0.0
    %703 = vmatpush1.msra.mxu0 0.0
    %704 = vmatprep.subr.mxu0 0.0
    %705 = vmatpush1.msra.mxu0 0.0
    %706 = vmatprep.subr.mxu0 0.0
    %707 = vmatpush1.msra.mxu0 0.0
    %708 = vmatprep.subr.mxu0 0.0
    %709 = vmatpush1.msra.mxu0 0.0
    %710 = vmatprep.subr.mxu0 0.0
    %711 = vmatpush1.msra.mxu0 0.0
    %712 = vmatprep.subr.mxu0 0.0
    %713 = vmatpush1.msra.mxu0 0.0
    %714 = vmatprep.subr.mxu0 0.0
    %715 = vmatpush1.msra.mxu0 0.0
    %716 = vmatprep.subr.mxu0 0.0
    %717 = vmatpush1.msra.mxu0 0.0
    %718 = vmatprep.subr.mxu0 0.0
    %719 = vmatpush1.msra.mxu0 0.0
    %720 = vmatprep.subr.mxu0 0.0
    %721 = vmatpush1.msra.mxu0 0.0
    %722 = vmatprep.subr.mxu0 0.0
    %723 = vmatpush1.msra.mxu0 0.0
    %724 = vmatprep.subr.mxu0 0.0
    %725 = vmatpush1.msra.mxu0 0.0
    %726 = vmatprep.subr.mxu0 0.0
    %727 = vmatpush1.msra.mxu0 0.0
    %728 = vmatprep.subr.mxu0 0.0
    %729 = vmatpush1.msra.mxu0 0.0
    %730 = vmatprep.subr.mxu0 0.0
    %731 = vmatpush1.msra.mxu0 0.0
    %732 = vmatprep.subr.mxu0 0.0
    %733 = vmatpush1.msra.mxu0 0.0
    %734 = vmatprep.subr.mxu0 0.0
    %735 = vmatpush1.msra.mxu0 0.0
    %736 = vmatprep.subr.mxu0 0.0
    %737 = vmatpush1.msra.mxu0 0.0
    %738 = vmatprep.subr.mxu0 0.0
    %739 = vmatpush1.msra.mxu0 0.0
    %740 = vmatprep.subr.mxu0 0.0
    %741 = vmatpush1.msra.mxu0 0.0
    %742 = vmatprep.subr.mxu0 0.0
    %743 = vmatpush1.msra.mxu0 0.0
    %744 = vmatprep.subr.mxu0 0.0
    %745 = vmatpush1.msra.mxu0 0.0
    %746 = vmatprep.subr.mxu0 0.0
    %747 = vmatpush1.msra.mxu0 0.0
    %748 = vmatprep.subr.mxu0 0.0
    %749 = vmatpush1.msra.mxu0 0.0
    %750 = vmatprep.subr.mxu0 0.0
    %751 = vmatpush1.msra.mxu0 0.0
    %752 = vmatprep.subr.mxu0 0.0
    %753 = vmatpush1.msra.mxu0 0.0
    %754 = vmatprep.subr.mxu0 0.0
    %755 = vmatpush1.msra.mxu0 0.0
    %756 = vmatprep.subr.mxu0 0.0
    %757 = vmatpush1.msra.mxu0 0.0
    %758 = vmatprep.subr.mxu0 0.0
    %759 = vmatpush1.msra.mxu0 0.0
    %760 = vmatprep.subr.mxu0 0.0
    %761 = vmatpush1.msra.mxu0 0.0
    %762 = vmatprep.mubr.f32.mxu0 0.0
    %763 = vmatmul.mubr.f32.gmra.mrb[0].mxu0 %v696
    %v764 = vpop.f32.mrb[0].mxu0
    %v765 = vadd.f32 %v691, %v764
    %v766 = vpop.f32.mrb[0].mxu0
    %v767 = vadd.f32 %v693, %v766
    %768 = vdwg.mxu0
    %769 = vrot.lane.b32.xlu0 %v64, 111
    %v770 = vpop.permute.xlu0 %769
    %771 = vrot.lane.b32.xlu0 %v65, 111
    %v772 = vpop.permute.xlu0 %771
    %vm773 = vcmp.lt.s32.totalorder %v22, 111
    %v774 = vsel %vm773, %v770, %v772
    %v775 = vsel %vm773, %v772, %v770
    %v776 = vsel %vm62, 1, 0
    %v777 = vsel %vm63, 1, 0
    %vm778 = vcmp.eq.s32.totalorder %v776, 1
    %vm779 = vcmp.eq.s32.totalorder %v777, 1
    %v780 = vsel %vm778, %v774, 0.0
    %v781 = vsel %vm779, %v775, 0.0
    %s782 = scalar_lea.vmem %s1, 64
    %v783 = vld [vmem:[%s782] sm:$0xff]
    %v785 = vsel %vm95, %v783, 0
    %787 = vmatprep.subr.mxu0 %v781
    %788 = vmatpush1.msra.mxu0 %v780
    %789 = vmatprep.subr.mxu0 0.0
    %790 = vmatpush1.msra.mxu0 0.0
    %791 = vmatprep.subr.mxu0 0.0
    %792 = vmatpush1.msra.mxu0 0.0
    %793 = vmatprep.subr.mxu0 0.0
    %794 = vmatpush1.msra.mxu0 0.0
    %795 = vmatprep.subr.mxu0 0.0
    %796 = vmatpush1.msra.mxu0 0.0
    %797 = vmatprep.subr.mxu0 0.0
    %798 = vmatpush1.msra.mxu0 0.0
    %799 = vmatprep.subr.mxu0 0.0
    %800 = vmatpush1.msra.mxu0 0.0
    %801 = vmatprep.subr.mxu0 0.0
    %802 = vmatpush1.msra.mxu0 0.0
    %803 = vmatprep.subr.mxu0 0.0
    %804 = vmatpush1.msra.mxu0 0.0
    %805 = vmatprep.subr.mxu0 0.0
    %806 = vmatpush1.msra.mxu0 0.0
    %807 = vmatprep.subr.mxu0 0.0
    %808 = vmatpush1.msra.mxu0 0.0
    %809 = vmatprep.subr.mxu0 0.0
    %810 = vmatpush1.msra.mxu0 0.0
    %811 = vmatprep.subr.mxu0 0.0
    %812 = vmatpush1.msra.mxu0 0.0
    %813 = vmatprep.subr.mxu0 0.0
    %814 = vmatpush1.msra.mxu0 0.0
    %815 = vmatprep.subr.mxu0 0.0
    %816 = vmatpush1.msra.mxu0 0.0
    %817 = vmatprep.subr.mxu0 0.0
    %818 = vmatpush1.msra.mxu0 0.0
    %819 = vmatprep.subr.mxu0 0.0
    %820 = vmatpush1.msra.mxu0 0.0
    %821 = vmatprep.subr.mxu0 0.0
    %822 = vmatpush1.msra.mxu0 0.0
    %823 = vmatprep.subr.mxu0 0.0
    %824 = vmatpush1.msra.mxu0 0.0
    %825 = vmatprep.subr.mxu0 0.0
    %826 = vmatpush1.msra.mxu0 0.0
    %827 = vmatprep.subr.mxu0 0.0
    %828 = vmatpush1.msra.mxu0 0.0
    %829 = vmatprep.subr.mxu0 0.0
    %830 = vmatpush1.msra.mxu0 0.0
    %831 = vmatprep.subr.mxu0 0.0
    %832 = vmatpush1.msra.mxu0 0.0
    %833 = vmatprep.subr.mxu0 0.0
    %834 = vmatpush1.msra.mxu0 0.0
    %835 = vmatprep.subr.mxu0 0.0
    %836 = vmatpush1.msra.mxu0 0.0
    %837 = vmatprep.subr.mxu0 0.0
    %838 = vmatpush1.msra.mxu0 0.0
    %839 = vmatprep.subr.mxu0 0.0
    %840 = vmatpush1.msra.mxu0 0.0
    %841 = vmatprep.subr.mxu0 0.0
    %842 = vmatpush1.msra.mxu0 0.0
    %843 = vmatprep.subr.mxu0 0.0
    %844 = vmatpush1.msra.mxu0 0.0
    %845 = vmatprep.subr.mxu0 0.0
    %846 = vmatpush1.msra.mxu0 0.0
    %847 = vmatprep.subr.mxu0 0.0
    %848 = vmatpush1.msra.mxu0 0.0
    %849 = vmatprep.subr.mxu0 0.0
    %850 = vmatpush1.msra.mxu0 0.0
    %851 = vmatprep.mubr.f32.mxu0 0.0
    %852 = vmatmul.mubr.f32.gmra.mrb[0].mxu0 %v785
    %v853 = vpop.f32.mrb[0].mxu0
    %v854 = vadd.f32 0.0, %v853
    %v855 = vpop.f32.mrb[0].mxu0
    %v856 = vadd.f32 0.0, %v855
    %857 = vdwg.mxu0
    %v858 = vadd.f32 %v765, %v854
    %v859 = vadd.f32 %v767, %v856
    %v860 = vadd.f32 %v333, %v589
    %v861 = vadd.f32 %v334, %v590
    %v862 = vadd.f32 %v860, %v858
    %v863 = vadd.f32 %v861, %v859
    %v864 = vld [vmem:[%s2] sm:$0xff]
    %866 = vset.pattern.permute.xlu0 0
    %867 = vperm.xlu0 %866, %v864
    %v868 = vpop.permute.xlu0 %867
    %v870 = vadd.f32 %v862, %v868
    %v871 = vadd.f32 %v863, %v868
    %v872 = vmax.f32 %v870, 0.0
    %v873 = vmax.f32 %v871, 0.0
    %874 = vrot.lane.b32.xlu0 %v872, 17
    %v875 = vpop.permute.xlu0 %874
    %876 = vrot.lane.b32.xlu0 %v873, 17
    %v877 = vpop.permute.xlu0 %876
    %v878 = vsel %vm70, %v875, %v877
    %v879 = vsel %vm70, %v877, %v875
    %v880 = vsel %vm75, %v879, 0.0
    %v881 = vsel %vm76, %v878, 0.0
    %v882 = vld [vmem:[%s3] sm:$0xff]
    %883 = vrot.lane.b32.xlu0 %v872, 16
    %v884 = vpop.permute.xlu0 %883
    %885 = vrot.lane.b32.xlu0 %v873, 16
    %v886 = vpop.permute.xlu0 %885
    %v887 = vsel %vm84, %v884, %v886
    %v888 = vsel %vm84, %v886, %v884
    %v889 = vsel %vm89, %v888, 0.0
    %v890 = vsel %vm90, %v887, 0.0
    %s891 = scalar_lea.vmem %s3, 8
    %v892 = vld [vmem:[%s891] sm:$0xff]
    %v894 = vsel %vm95, %v892, 0
    %896 = vmatprep.subr.mxu0 %v890
    %897 = vmatpush1.msra.mxu0 %v889
    %898 = vmatprep.subr.mxu0 0.0
    %899 = vmatpush1.msra.mxu0 0.0
    %900 = vmatprep.subr.mxu0 0.0
    %901 = vmatpush1.msra.mxu0 0.0
    %902 = vmatprep.subr.mxu0 0.0
    %903 = vmatpush1.msra.mxu0 0.0
    %904 = vmatprep.subr.mxu0 0.0
    %905 = vmatpush1.msra.mxu0 0.0
    %906 = vmatprep.subr.mxu0 0.0
    %907 = vmatpush1.msra.mxu0 0.0
    %908 = vmatprep.subr.mxu0 0.0
    %909 = vmatpush1.msra.mxu0 0.0
    %910 = vmatprep.subr.mxu0 0.0
    %911 = vmatpush1.msra.mxu0 0.0
    %912 = vmatprep.subr.mxu0 0.0
    %913 = vmatpush1.msra.mxu0 0.0
    %914 = vmatprep.subr.mxu0 0.0
    %915 = vmatpush1.msra.mxu0 0.0
    %916 = vmatprep.subr.mxu0 0.0
    %917 = vmatpush1.msra.mxu0 0.0
    %918 = vmatprep.subr.mxu0 0.0
    %919 = vmatpush1.msra.mxu0 0.0
    %920 = vmatprep.subr.mxu0 0.0
    %921 = vmatpush1.msra.mxu0 0.0
    %922 = vmatprep.subr.mxu0 0.0
    %923 = vmatpush1.msra.mxu0 0.0
    %924 = vmatprep.subr.mxu0 0.0
    %925 = vmatpush1.msra.mxu0 0.0
    %926 = vmatprep.subr.mxu0 0.0
    %927 = vmatpush1.msra.mxu0 0.0
    %928 = vmatprep.subr.mxu0 0.0
    %929 = vmatpush1.msra.mxu0 0.0
    %930 = vmatprep.subr.mxu0 0.0
    %931 = vmatpush1.msra.mxu0 0.0
    %932 = vmatprep.subr.mxu0 0.0
    %933 = vmatpush1.msra.mxu0 0.0
    %934 = vmatprep.subr.mxu0 0.0
    %935 = vmatpush1.msra.mxu0 0.0
    %936 = vmatprep.subr.mxu0 0.0
    %937 = vmatpush1.msra.mxu0 0.0
    %938 = vmatprep.subr.mxu0 0.0
    %939 = vmatpush1.msra.mxu0 0.0
    %940 = vmatprep.subr.mxu0 0.0
    %941 = vmatpush1.msra.mxu0 0.0
    %942 = vmatprep.subr.mxu0 0.0
    %943 = vmatpush1.msra.mxu0 0.0
    %944 = vmatprep.subr.mxu0 0.0
    %945 = vmatpush1.msra.mxu0 0.0
    %946 = vmatprep.subr.mxu0 0.0
    %947 = vmatpush1.msra.mxu0 0.0
    %948 = vmatprep.subr.mxu0 0.0
    %949 = vmatpush1.msra.mxu0 0.0
    %950 = vmatprep.subr.mxu0 0.0
    %951 = vmatpush1.msra.mxu0 0.0
    %952 = vmatprep.subr.mxu0 0.0
    %953 = vmatpush1.msra.mxu0 0.0
    %954 = vmatprep.subr.mxu0 0.0
    %955 = vmatpush1.msra.mxu0 0.0
    %956 = vmatprep.subr.mxu0 0.0
    %957 = vmatpush1.msra.mxu0 0.0
    %958 = vmatprep.subr.mxu0 0.0
    %959 = vmatpush1.msra.mxu0 0.0
    %960 = vmatprep.mubr.f32.mxu0 0.0
    %961 = vmatmul.mubr.f32.gmra.mrb[0].mxu0 %v894
    %v962 = vpop.f32.mrb[0].mxu0
    %v963 = vadd.f32 0.0, %v962
    %v964 = vpop.f32.mrb[0].mxu0
    %v965 = vadd.f32 0.0, %v964
    %966 = vdwg.mxu0
    %v968 = vsel %vm95, %v882, 0
    %970 = vmatprep.subr.mxu0 %v881
    %971 = vmatpush1.msra.mxu0 %v880
    %972 = vmatprep.subr.mxu0 0.0
    %973 = vmatpush1.msra.mxu0 0.0
    %974 = vmatprep.subr.mxu0 0.0
    %975 = vmatpush1.msra.mxu0 0.0
    %976 = vmatprep.subr.mxu0 0.0
    %977 = vmatpush1.msra.mxu0 0.0
    %978 = vmatprep.subr.mxu0 0.0
    %979 = vmatpush1.msra.mxu0 0.0
    %980 = vmatprep.subr.mxu0 0.0
    %981 = vmatpush1.msra.mxu0 0.0
    %982 = vmatprep.subr.mxu0 0.0
    %983 = vmatpush1.msra.mxu0 0.0
    %984 = vmatprep.subr.mxu0 0.0
    %985 = vmatpush1.msra.mxu0 0.0
    %986 = vmatprep.subr.mxu0 0.0
    %987 = vmatpush1.msra.mxu0 0.0
    %988 = vmatprep.subr.mxu0 0.0
    %989 = vmatpush1.msra.mxu0 0.0
    %990 = vmatprep.subr.mxu0 0.0
    %991 = vmatpush1.msra.mxu0 0.0
    %992 = vmatprep.subr.mxu0 0.0
    %993 = vmatpush1.msra.mxu0 0.0
    %994 = vmatprep.subr.mxu0 0.0
    %995 = vmatpush1.msra.mxu0 0.0
    %996 = vmatprep.subr.mxu0 0.0
    %997 = vmatpush1.msra.mxu0 0.0
    %998 = vmatprep.subr.mxu0 0.0
    %999 = vmatpush1.msra.mxu0 0.0
    %1000 = vmatprep.subr.mxu0 0.0
    %1001 = vmatpush1.msra.mxu0 0.0
    %1002 = vmatprep.subr.mxu0 0.0
    %1003 = vmatpush1.msra.mxu0 0.0
    %1004 = vmatprep.subr.mxu0 0.0
    %1005 = vmatpush1.msra.mxu0 0.0
    %1006 = vmatprep.subr.mxu0 0.0
    %1007 = vmatpush1.msra.mxu0 0.0
    %1008 = vmatprep.subr.mxu0 0.0
    %1009 = vmatpush1.msra.mxu0 0.0
    %1010 = vmatprep.subr.mxu0 0.0
    %1011 = vmatpush1.msra.mxu0 0.0
    %1012 = vmatprep.subr.mxu0 0.0
    %1013 = vmatpush1.msra.mxu0 0.0
    %1014 = vmatprep.subr.mxu0 0.0
    %1015 = vmatpush1.msra.mxu0 0.0
    %1016 = vmatprep.subr.mxu0 0.0
    %1017 = vmatpush1.msra.mxu0 0.0
    %1018 = vmatprep.subr.mxu0 0.0
    %1019 = vmatpush1.msra.mxu0 0.0
    %1020 = vmatprep.subr.mxu0 0.0
    %1021 = vmatpush1.msra.mxu0 0.0
    %1022 = vmatprep.subr.mxu0 0.0
    %1023 = vmatpush1.msra.mxu0 0.0
    %1024 = vmatprep.subr.mxu0 0.0
    %1025 = vmatpush1.msra.mxu0 0.0
    %1026 = vmatprep.subr.mxu0 0.0
    %1027 = vmatpush1.msra.mxu0 0.0
    %1028 = vmatprep.subr.mxu0 0.0
    %1029 = vmatpush1.msra.mxu0 0.0
    %1030 = vmatprep.subr.mxu0 0.0
    %1031 = vmatpush1.msra.mxu0 0.0
    %1032 = vmatprep.subr.mxu0 0.0
    %1033 = vmatpush1.msra.mxu0 0.0
    %1034 = vmatprep.mubr.f32.mxu0 0.0
    %1035 = vmatmul.mubr.f32.gmra.mrb[0].mxu0 %v968
    %v1036 = vpop.f32.mrb[0].mxu0
    %v1037 = vadd.f32 %v963, %v1036
    %v1038 = vpop.f32.mrb[0].mxu0
    %v1039 = vadd.f32 %v965, %v1038
    %1040 = vdwg.mxu0
    %1041 = vrot.lane.b32.xlu0 %v872, 15
    %v1042 = vpop.permute.xlu0 %1041
    %1043 = vrot.lane.b32.xlu0 %v873, 15
    %v1044 = vpop.permute.xlu0 %1043
    %v1045 = vsel %vm248, %v1042, %v1044
    %v1046 = vsel %vm248, %v1044, %v1042
    %v1047 = vsel %vm253, %v1046, 0.0
    %v1048 = vsel %vm254, %v1045, 0.0
    %s1049 = scalar_lea.vmem %s3, 16
    %v1050 = vld [vmem:[%s1049] sm:$0xff]
    %v1052 = vsel %vm95, %v1050, 0
    %1054 = vmatprep.subr.mxu0 %v1048
    %1055 = vmatpush1.msra.mxu0 %v1047
    %1056 = vmatprep.subr.mxu0 0.0
    %1057 = vmatpush1.msra.mxu0 0.0
    %1058 = vmatprep.subr.mxu0 0.0
    %1059 = vmatpush1.msra.mxu0 0.0
    %1060 = vmatprep.subr.mxu0 0.0
    %1061 = vmatpush1.msra.mxu0 0.0
    %1062 = vmatprep.subr.mxu0 0.0
    %1063 = vmatpush1.msra.mxu0 0.0
    %1064 = vmatprep.subr.mxu0 0.0
    %1065 = vmatpush1.msra.mxu0 0.0
    %1066 = vmatprep.subr.mxu0 0.0
    %1067 = vmatpush1.msra.mxu0 0.0
    %1068 = vmatprep.subr.mxu0 0.0
    %1069 = vmatpush1.msra.mxu0 0.0
    %1070 = vmatprep.subr.mxu0 0.0
    %1071 = vmatpush1.msra.mxu0 0.0
    %1072 = vmatprep.subr.mxu0 0.0
    %1073 = vmatpush1.msra.mxu0 0.0
    %1074 = vmatprep.subr.mxu0 0.0
    %1075 = vmatpush1.msra.mxu0 0.0
    %1076 = vmatprep.subr.mxu0 0.0
    %1077 = vmatpush1.msra.mxu0 0.0
    %1078 = vmatprep.subr.mxu0 0.0
    %1079 = vmatpush1.msra.mxu0 0.0
    %1080 = vmatprep.subr.mxu0 0.0
    %1081 = vmatpush1.msra.mxu0 0.0
    %1082 = vmatprep.subr.mxu0 0.0
    %1083 = vmatpush1.msra.mxu0 0.0
    %1084 = vmatprep.subr.mxu0 0.0
    %1085 = vmatpush1.msra.mxu0 0.0
    %1086 = vmatprep.subr.mxu0 0.0
    %1087 = vmatpush1.msra.mxu0 0.0
    %1088 = vmatprep.subr.mxu0 0.0
    %1089 = vmatpush1.msra.mxu0 0.0
    %1090 = vmatprep.subr.mxu0 0.0
    %1091 = vmatpush1.msra.mxu0 0.0
    %1092 = vmatprep.subr.mxu0 0.0
    %1093 = vmatpush1.msra.mxu0 0.0
    %1094 = vmatprep.subr.mxu0 0.0
    %1095 = vmatpush1.msra.mxu0 0.0
    %1096 = vmatprep.subr.mxu0 0.0
    %1097 = vmatpush1.msra.mxu0 0.0
    %1098 = vmatprep.subr.mxu0 0.0
    %1099 = vmatpush1.msra.mxu0 0.0
    %1100 = vmatprep.subr.mxu0 0.0
    %1101 = vmatpush1.msra.mxu0 0.0
    %1102 = vmatprep.subr.mxu0 0.0
    %1103 = vmatpush1.msra.mxu0 0.0
    %1104 = vmatprep.subr.mxu0 0.0
    %1105 = vmatpush1.msra.mxu0 0.0
    %1106 = vmatprep.subr.mxu0 0.0
    %1107 = vmatpush1.msra.mxu0 0.0
    %1108 = vmatprep.subr.mxu0 0.0
    %1109 = vmatpush1.msra.mxu0 0.0
    %1110 = vmatprep.subr.mxu0 0.0
    %1111 = vmatpush1.msra.mxu0 0.0
    %1112 = vmatprep.subr.mxu0 0.0
    %1113 = vmatpush1.msra.mxu0 0.0
    %1114 = vmatprep.subr.mxu0 0.0
    %1115 = vmatpush1.msra.mxu0 0.0
    %1116 = vmatprep.subr.mxu0 0.0
    %1117 = vmatpush1.msra.mxu0 0.0
    %1118 = vmatprep.mubr.f32.mxu0 0.0
    %1119 = vmatmul.mubr.f32.gmra.mrb[0].mxu0 %v1052
    %v1120 = vpop.f32.mrb[0].mxu0
    %v1121 = vadd.f32 0.0, %v1120
    %v1122 = vpop.f32.mrb[0].mxu0
    %v1123 = vadd.f32 0.0, %v1122
    %1124 = vdwg.mxu0
    %v1125 = vadd.f32 %v1037, %v1121
    %v1126 = vadd.f32 %v1039, %v1123
    %1127 = vrot.lane.b32.xlu0 %v872, 1
    %v1128 = vpop.permute.xlu0 %1127
    %1129 = vrot.lane.b32.xlu0 %v873, 1
    %v1130 = vpop.permute.xlu0 %1129
    %v1131 = vsel %vm339, %v1128, %v1130
    %v1132 = vsel %vm339, %v1130, %v1128
    %v1133 = vsel %vm344, %v1132, 0.0
    %v1134 = vsel %vm345, %v1131, 0.0
    %s1135 = scalar_lea.vmem %s3, 24
    %v1136 = vld [vmem:[%s1135] sm:$0xff]
    %s1137 = scalar_lea.vmem %s3, 32
    %v1138 = vld [vmem:[%s1137] sm:$0xff]
    %v1140 = vsel %vm95, %v1138, 0
    %1142 = vmatprep.subr.mxu0 %v873
    %1143 = vmatpush1.msra.mxu0 %v872
    %1144 = vmatprep.subr.mxu0 0.0
    %1145 = vmatpush1.msra.mxu0 0.0
    %1146 = vmatprep.subr.mxu0 0.0
    %1147 = vmatpush1.msra.mxu0 0.0
    %1148 = vmatprep.subr.mxu0 0.0
    %1149 = vmatpush1.msra.mxu0 0.0
    %1150 = vmatprep.subr.mxu0 0.0
    %1151 = vmatpush1.msra.mxu0 0.0
    %1152 = vmatprep.subr.mxu0 0.0
    %1153 = vmatpush1.msra.mxu0 0.0
    %1154 = vmatprep.subr.mxu0 0.0
    %1155 = vmatpush1.msra.mxu0 0.0
    %1156 = vmatprep.subr.mxu0 0.0
    %1157 = vmatpush1.msra.mxu0 0.0
    %1158 = vmatprep.subr.mxu0 0.0
    %1159 = vmatpush1.msra.mxu0 0.0
    %1160 = vmatprep.subr.mxu0 0.0
    %1161 = vmatpush1.msra.mxu0 0.0
    %1162 = vmatprep.subr.mxu0 0.0
    %1163 = vmatpush1.msra.mxu0 0.0
    %1164 = vmatprep.subr.mxu0 0.0
    %1165 = vmatpush1.msra.mxu0 0.0
    %1166 = vmatprep.subr.mxu0 0.0
    %1167 = vmatpush1.msra.mxu0 0.0
    %1168 = vmatprep.subr.mxu0 0.0
    %1169 = vmatpush1.msra.mxu0 0.0
    %1170 = vmatprep.subr.mxu0 0.0
    %1171 = vmatpush1.msra.mxu0 0.0
    %1172 = vmatprep.subr.mxu0 0.0
    %1173 = vmatpush1.msra.mxu0 0.0
    %1174 = vmatprep.subr.mxu0 0.0
    %1175 = vmatpush1.msra.mxu0 0.0
    %1176 = vmatprep.subr.mxu0 0.0
    %1177 = vmatpush1.msra.mxu0 0.0
    %1178 = vmatprep.subr.mxu0 0.0
    %1179 = vmatpush1.msra.mxu0 0.0
    %1180 = vmatprep.subr.mxu0 0.0
    %1181 = vmatpush1.msra.mxu0 0.0
    %1182 = vmatprep.subr.mxu0 0.0
    %1183 = vmatpush1.msra.mxu0 0.0
    %1184 = vmatprep.subr.mxu0 0.0
    %1185 = vmatpush1.msra.mxu0 0.0
    %1186 = vmatprep.subr.mxu0 0.0
    %1187 = vmatpush1.msra.mxu0 0.0
    %1188 = vmatprep.subr.mxu0 0.0
    %1189 = vmatpush1.msra.mxu0 0.0
    %1190 = vmatprep.subr.mxu0 0.0
    %1191 = vmatpush1.msra.mxu0 0.0
    %1192 = vmatprep.subr.mxu0 0.0
    %1193 = vmatpush1.msra.mxu0 0.0
    %1194 = vmatprep.subr.mxu0 0.0
    %1195 = vmatpush1.msra.mxu0 0.0
    %1196 = vmatprep.subr.mxu0 0.0
    %1197 = vmatpush1.msra.mxu0 0.0
    %1198 = vmatprep.subr.mxu0 0.0
    %1199 = vmatpush1.msra.mxu0 0.0
    %1200 = vmatprep.subr.mxu0 0.0
    %1201 = vmatpush1.msra.mxu0 0.0
    %1202 = vmatprep.subr.mxu0 0.0
    %1203 = vmatpush1.msra.mxu0 0.0
    %1204 = vmatprep.subr.mxu0 0.0
    %1205 = vmatpush1.msra.mxu0 0.0
    %1206 = vmatprep.mubr.f32.mxu0 0.0
    %1207 = vmatmul.mubr.f32.gmra.mrb[0].mxu0 %v1140
    %v1208 = vpop.f32.mrb[0].mxu0
    %v1209 = vadd.f32 0.0, %v1208
    %v1210 = vpop.f32.mrb[0].mxu0
    %v1211 = vadd.f32 0.0, %v1210
    %1212 = vdwg.mxu0
    %v1214 = vsel %vm95, %v1136, 0
    %1216 = vmatprep.subr.mxu0 %v1134
    %1217 = vmatpush1.msra.mxu0 %v1133
    %1218 = vmatprep.subr.mxu0 0.0
    %1219 = vmatpush1.msra.mxu0 0.0
    %1220 = vmatprep.subr.mxu0 0.0
    %1221 = vmatpush1.msra.mxu0 0.0
    %1222 = vmatprep.subr.mxu0 0.0
    %1223 = vmatpush1.msra.mxu0 0.0
    %1224 = vmatprep.subr.mxu0 0.0
    %1225 = vmatpush1.msra.mxu0 0.0
    %1226 = vmatprep.subr.mxu0 0.0
    %1227 = vmatpush1.msra.mxu0 0.0
    %1228 = vmatprep.subr.mxu0 0.0
    %1229 = vmatpush1.msra.mxu0 0.0
    %1230 = vmatprep.subr.mxu0 0.0
    %1231 = vmatpush1.msra.mxu0 0.0
    %1232 = vmatprep.subr.mxu0 0.0
    %1233 = vmatpush1.msra.mxu0 0.0
    %1234 = vmatprep.subr.mxu0 0.0
    %1235 = vmatpush1.msra.mxu0 0.0
    %1236 = vmatprep.subr.mxu0 0.0
    %1237 = vmatpush1.msra.mxu0 0.0
    %1238 = vmatprep.subr.mxu0 0.0
    %1239 = vmatpush1.msra.mxu0 0.0
    %1240 = vmatprep.subr.mxu0 0.0
    %1241 = vmatpush1.msra.mxu0 0.0
    %1242 = vmatprep.subr.mxu0 0.0
    %1243 = vmatpush1.msra.mxu0 0.0
    %1244 = vmatprep.subr.mxu0 0.0
    %1245 = vmatpush1.msra.mxu0 0.0
    %1246 = vmatprep.subr.mxu0 0.0
    %1247 = vmatpush1.msra.mxu0 0.0
    %1248 = vmatprep.subr.mxu0 0.0
    %1249 = vmatpush1.msra.mxu0 0.0
    %1250 = vmatprep.subr.mxu0 0.0
    %1251 = vmatpush1.msra.mxu0 0.0
    %1252 = vmatprep.subr.mxu0 0.0
    %1253 = vmatpush1.msra.mxu0 0.0
    %1254 = vmatprep.subr.mxu0 0.0
    %1255 = vmatpush1.msra.mxu0 0.0
    %1256 = vmatprep.subr.mxu0 0.0
    %1257 = vmatpush1.msra.mxu0 0.0
    %1258 = vmatprep.subr.mxu0 0.0
    %1259 = vmatpush1.msra.mxu0 0.0
    %1260 = vmatprep.subr.mxu0 0.0
    %1261 = vmatpush1.msra.mxu0 0.0
    %1262 = vmatprep.subr.mxu0 0.0
    %1263 = vmatpush1.msra.mxu0 0.0
    %1264 = vmatprep.subr.mxu0 0.0
    %1265 = vmatpush1.msra.mxu0 0.0
    %1266 = vmatprep.subr.mxu0 0.0
    %1267 = vmatpush1.msra.mxu0 0.0
    %1268 = vmatprep.subr.mxu0 0.0
    %1269 = vmatpush1.msra.mxu0 0.0
    %1270 = vmatprep.subr.mxu0 0.0
    %1271 = vmatpush1.msra.mxu0 0.0
    %1272 = vmatprep.subr.mxu0 0.0
    %1273 = vmatpush1.msra.mxu0 0.0
    %1274 = vmatprep.subr.mxu0 0.0
    %1275 = vmatpush1.msra.mxu0 0.0
    %1276 = vmatprep.subr.mxu0 0.0
    %1277 = vmatpush1.msra.mxu0 0.0
    %1278 = vmatprep.subr.mxu0 0.0
    %1279 = vmatpush1.msra.mxu0 0.0
    %1280 = vmatprep.mubr.f32.mxu0 0.0
    %1281 = vmatmul.mubr.f32.gmra.mrb[0].mxu0 %v1214
    %v1282 = vpop.f32.mrb[0].mxu0
    %v1283 = vadd.f32 %v1209, %v1282
    %v1284 = vpop.f32.mrb[0].mxu0
    %v1285 = vadd.f32 %v1211, %v1284
    %1286 = vdwg.mxu0
    %1287 = vrot.lane.b32.xlu0 %v872, 127
    %v1288 = vpop.permute.xlu0 %1287
    %1289 = vrot.lane.b32.xlu0 %v873, 127
    %v1290 = vpop.permute.xlu0 %1289
    %v1291 = vsel %vm504, %v1288, %v1290
    %v1292 = vsel %vm504, %v1290, %v1288
    %v1293 = vsel %vm509, %v1291, 0.0
    %v1294 = vsel %vm510, %v1292, 0.0
    %s1295 = scalar_lea.vmem %s3, 40
    %v1296 = vld [vmem:[%s1295] sm:$0xff]
    %v1298 = vsel %vm95, %v1296, 0
    %1300 = vmatprep.subr.mxu0 %v1294
    %1301 = vmatpush1.msra.mxu0 %v1293
    %1302 = vmatprep.subr.mxu0 0.0
    %1303 = vmatpush1.msra.mxu0 0.0
    %1304 = vmatprep.subr.mxu0 0.0
    %1305 = vmatpush1.msra.mxu0 0.0
    %1306 = vmatprep.subr.mxu0 0.0
    %1307 = vmatpush1.msra.mxu0 0.0
    %1308 = vmatprep.subr.mxu0 0.0
    %1309 = vmatpush1.msra.mxu0 0.0
    %1310 = vmatprep.subr.mxu0 0.0
    %1311 = vmatpush1.msra.mxu0 0.0
    %1312 = vmatprep.subr.mxu0 0.0
    %1313 = vmatpush1.msra.mxu0 0.0
    %1314 = vmatprep.subr.mxu0 0.0
    %1315 = vmatpush1.msra.mxu0 0.0
    %1316 = vmatprep.subr.mxu0 0.0
    %1317 = vmatpush1.msra.mxu0 0.0
    %1318 = vmatprep.subr.mxu0 0.0
    %1319 = vmatpush1.msra.mxu0 0.0
    %1320 = vmatprep.subr.mxu0 0.0
    %1321 = vmatpush1.msra.mxu0 0.0
    %1322 = vmatprep.subr.mxu0 0.0
    %1323 = vmatpush1.msra.mxu0 0.0
    %1324 = vmatprep.subr.mxu0 0.0
    %1325 = vmatpush1.msra.mxu0 0.0
    %1326 = vmatprep.subr.mxu0 0.0
    %1327 = vmatpush1.msra.mxu0 0.0
    %1328 = vmatprep.subr.mxu0 0.0
    %1329 = vmatpush1.msra.mxu0 0.0
    %1330 = vmatprep.subr.mxu0 0.0
    %1331 = vmatpush1.msra.mxu0 0.0
    %1332 = vmatprep.subr.mxu0 0.0
    %1333 = vmatpush1.msra.mxu0 0.0
    %1334 = vmatprep.subr.mxu0 0.0
    %1335 = vmatpush1.msra.mxu0 0.0
    %1336 = vmatprep.subr.mxu0 0.0
    %1337 = vmatpush1.msra.mxu0 0.0
    %1338 = vmatprep.subr.mxu0 0.0
    %1339 = vmatpush1.msra.mxu0 0.0
    %1340 = vmatprep.subr.mxu0 0.0
    %1341 = vmatpush1.msra.mxu0 0.0
    %1342 = vmatprep.subr.mxu0 0.0
    %1343 = vmatpush1.msra.mxu0 0.0
    %1344 = vmatprep.subr.mxu0 0.0
    %1345 = vmatpush1.msra.mxu0 0.0
    %1346 = vmatprep.subr.mxu0 0.0
    %1347 = vmatpush1.msra.mxu0 0.0
    %1348 = vmatprep.subr.mxu0 0.0
    %1349 = vmatpush1.msra.mxu0 0.0
    %1350 = vmatprep.subr.mxu0 0.0
    %1351 = vmatpush1.msra.mxu0 0.0
    %1352 = vmatprep.subr.mxu0 0.0
    %1353 = vmatpush1.msra.mxu0 0.0
    %1354 = vmatprep.subr.mxu0 0.0
    %1355 = vmatpush1.msra.mxu0 0.0
    %1356 = vmatprep.subr.mxu0 0.0
    %1357 = vmatpush1.msra.mxu0 0.0
    %1358 = vmatprep.subr.mxu0 0.0
    %1359 = vmatpush1.msra.mxu0 0.0
    %1360 = vmatprep.subr.mxu0 0.0
    %1361 = vmatpush1.msra.mxu0 0.0
    %1362 = vmatprep.subr.mxu0 0.0
    %1363 = vmatpush1.msra.mxu0 0.0
    %1364 = vmatprep.mubr.f32.mxu0 0.0
    %1365 = vmatmul.mubr.f32.gmra.mrb[0].mxu0 %v1298
    %v1366 = vpop.f32.mrb[0].mxu0
    %v1367 = vadd.f32 0.0, %v1366
    %v1368 = vpop.f32.mrb[0].mxu0
    %v1369 = vadd.f32 0.0, %v1368
    %1370 = vdwg.mxu0
    %v1371 = vadd.f32 %v1283, %v1367
    %v1372 = vadd.f32 %v1285, %v1369
    %1373 = vrot.lane.b32.xlu0 %v872, 113
    %v1374 = vpop.permute.xlu0 %1373
    %1375 = vrot.lane.b32.xlu0 %v873, 113
    %v1376 = vpop.permute.xlu0 %1375
    %v1377 = vsel %vm595, %v1374, %v1376
    %v1378 = vsel %vm595, %v1376, %v1374
    %v1379 = vsel %vm600, %v1377, 0.0
    %v1380 = vsel %vm601, %v1378, 0.0
    %s1381 = scalar_lea.vmem %s3, 48
    %v1382 = vld [vmem:[%s1381] sm:$0xff]
    %1383 = vrot.lane.b32.xlu0 %v872, 112
    %v1384 = vpop.permute.xlu0 %1383
    %1385 = vrot.lane.b32.xlu0 %v873, 112
    %v1386 = vpop.permute.xlu0 %1385
    %v1387 = vsel %vm610, %v1384, %v1386
    %v1388 = vsel %vm610, %v1386, %v1384
    %v1389 = vsel %vm615, %v1387, 0.0
    %v1390 = vsel %vm616, %v1388, 0.0
    %s1391 = scalar_lea.vmem %s3, 56
    %v1392 = vld [vmem:[%s1391] sm:$0xff]
    %v1394 = vsel %vm95, %v1392, 0
    %1396 = vmatprep.subr.mxu0 %v1390
    %1397 = vmatpush1.msra.mxu0 %v1389
    %1398 = vmatprep.subr.mxu0 0.0
    %1399 = vmatpush1.msra.mxu0 0.0
    %1400 = vmatprep.subr.mxu0 0.0
    %1401 = vmatpush1.msra.mxu0 0.0
    %1402 = vmatprep.subr.mxu0 0.0
    %1403 = vmatpush1.msra.mxu0 0.0
    %1404 = vmatprep.subr.mxu0 0.0
    %1405 = vmatpush1.msra.mxu0 0.0
    %1406 = vmatprep.subr.mxu0 0.0
    %1407 = vmatpush1.msra.mxu0 0.0
    %1408 = vmatprep.subr.mxu0 0.0
    %1409 = vmatpush1.msra.mxu0 0.0
    %1410 = vmatprep.subr.mxu0 0.0
    %1411 = vmatpush1.msra.mxu0 0.0
    %1412 = vmatprep.subr.mxu0 0.0
    %1413 = vmatpush1.msra.mxu0 0.0
    %1414 = vmatprep.subr.mxu0 0.0
    %1415 = vmatpush1.msra.mxu0 0.0
    %1416 = vmatprep.subr.mxu0 0.0
    %1417 = vmatpush1.msra.mxu0 0.0
    %1418 = vmatprep.subr.mxu0 0.0
    %1419 = vmatpush1.msra.mxu0 0.0
    %1420 = vmatprep.subr.mxu0 0.0
    %1421 = vmatpush1.msra.mxu0 0.0
    %1422 = vmatprep.subr.mxu0 0.0
    %1423 = vmatpush1.msra.mxu0 0.0
    %1424 = vmatprep.subr.mxu0 0.0
    %1425 = vmatpush1.msra.mxu0 0.0
    %1426 = vmatprep.subr.mxu0 0.0
    %1427 = vmatpush1.msra.mxu0 0.0
    %1428 = vmatprep.subr.mxu0 0.0
    %1429 = vmatpush1.msra.mxu0 0.0
    %1430 = vmatprep.subr.mxu0 0.0
    %1431 = vmatpush1.msra.mxu0 0.0
    %1432 = vmatprep.subr.mxu0 0.0
    %1433 = vmatpush1.msra.mxu0 0.0
    %1434 = vmatprep.subr.mxu0 0.0
    %1435 = vmatpush1.msra.mxu0 0.0
    %1436 = vmatprep.subr.mxu0 0.0
    %1437 = vmatpush1.msra.mxu0 0.0
    %1438 = vmatprep.subr.mxu0 0.0
    %1439 = vmatpush1.msra.mxu0 0.0
    %1440 = vmatprep.subr.mxu0 0.0
    %1441 = vmatpush1.msra.mxu0 0.0
    %1442 = vmatprep.subr.mxu0 0.0
    %1443 = vmatpush1.msra.mxu0 0.0
    %1444 = vmatprep.subr.mxu0 0.0
    %1445 = vmatpush1.msra.mxu0 0.0
    %1446 = vmatprep.subr.mxu0 0.0
    %1447 = vmatpush1.msra.mxu0 0.0
    %1448 = vmatprep.subr.mxu0 0.0
    %1449 = vmatpush1.msra.mxu0 0.0
    %1450 = vmatprep.subr.mxu0 0.0
    %1451 = vmatpush1.msra.mxu0 0.0
    %1452 = vmatprep.subr.mxu0 0.0
    %1453 = vmatpush1.msra.mxu0 0.0
    %1454 = vmatprep.subr.mxu0 0.0
    %1455 = vmatpush1.msra.mxu0 0.0
    %1456 = vmatprep.subr.mxu0 0.0
    %1457 = vmatpush1.msra.mxu0 0.0
    %1458 = vmatprep.subr.mxu0 0.0
    %1459 = vmatpush1.msra.mxu0 0.0
    %1460 = vmatprep.mubr.f32.mxu0 0.0
    %1461 = vmatmul.mubr.f32.gmra.mrb[0].mxu0 %v1394
    %v1462 = vpop.f32.mrb[0].mxu0
    %v1463 = vadd.f32 0.0, %v1462
    %v1464 = vpop.f32.mrb[0].mxu0
    %v1465 = vadd.f32 0.0, %v1464
    %1466 = vdwg.mxu0
    %v1468 = vsel %vm95, %v1382, 0
    %1470 = vmatprep.subr.mxu0 %v1380
    %1471 = vmatpush1.msra.mxu0 %v1379
    %1472 = vmatprep.subr.mxu0 0.0
    %1473 = vmatpush1.msra.mxu0 0.0
    %1474 = vmatprep.subr.mxu0 0.0
    %1475 = vmatpush1.msra.mxu0 0.0
    %1476 = vmatprep.subr.mxu0 0.0
    %1477 = vmatpush1.msra.mxu0 0.0
    %1478 = vmatprep.subr.mxu0 0.0
    %1479 = vmatpush1.msra.mxu0 0.0
    %1480 = vmatprep.subr.mxu0 0.0
    %1481 = vmatpush1.msra.mxu0 0.0
    %1482 = vmatprep.subr.mxu0 0.0
    %1483 = vmatpush1.msra.mxu0 0.0
    %1484 = vmatprep.subr.mxu0 0.0
    %1485 = vmatpush1.msra.mxu0 0.0
    %1486 = vmatprep.subr.mxu0 0.0
    %1487 = vmatpush1.msra.mxu0 0.0
    %1488 = vmatprep.subr.mxu0 0.0
    %1489 = vmatpush1.msra.mxu0 0.0
    %1490 = vmatprep.subr.mxu0 0.0
    %1491 = vmatpush1.msra.mxu0 0.0
    %1492 = vmatprep.subr.mxu0 0.0
    %1493 = vmatpush1.msra.mxu0 0.0
    %1494 = vmatprep.subr.mxu0 0.0
    %1495 = vmatpush1.msra.mxu0 0.0
    %1496 = vmatprep.subr.mxu0 0.0
    %1497 = vmatpush1.msra.mxu0 0.0
    %1498 = vmatprep.subr.mxu0 0.0
    %1499 = vmatpush1.msra.mxu0 0.0
    %1500 = vmatprep.subr.mxu0 0.0
    %1501 = vmatpush1.msra.mxu0 0.0
    %1502 = vmatprep.subr.mxu0 0.0
    %1503 = vmatpush1.msra.mxu0 0.0
    %1504 = vmatprep.subr.mxu0 0.0
    %1505 = vmatpush1.msra.mxu0 0.0
    %1506 = vmatprep.subr.mxu0 0.0
    %1507 = vmatpush1.msra.mxu0 0.0
    %1508 = vmatprep.subr.mxu0 0.0
    %1509 = vmatpush1.msra.mxu0 0.0
    %1510 = vmatprep.subr.mxu0 0.0
    %1511 = vmatpush1.msra.mxu0 0.0
    %1512 = vmatprep.subr.mxu0 0.0
    %1513 = vmatpush1.msra.mxu0 0.0
    %1514 = vmatprep.subr.mxu0 0.0
    %1515 = vmatpush1.msra.mxu0 0.0
    %1516 = vmatprep.subr.mxu0 0.0
    %1517 = vmatpush1.msra.mxu0 0.0
    %1518 = vmatprep.subr.mxu0 0.0
    %1519 = vmatpush1.msra.mxu0 0.0
    %1520 = vmatprep.subr.mxu0 0.0
    %1521 = vmatpush1.msra.mxu0 0.0
    %1522 = vmatprep.subr.mxu0 0.0
    %1523 = vmatpush1.msra.mxu0 0.0
    %1524 = vmatprep.subr.mxu0 0.0
    %1525 = vmatpush1.msra.mxu0 0.0
    %1526 = vmatprep.subr.mxu0 0.0
    %1527 = vmatpush1.msra.mxu0 0.0
    %1528 = vmatprep.subr.mxu0 0.0
    %1529 = vmatpush1.msra.mxu0 0.0
    %1530 = vmatprep.subr.mxu0 0.0
    %1531 = vmatpush1.msra.mxu0 0.0
    %1532 = vmatprep.subr.mxu0 0.0
    %1533 = vmatpush1.msra.mxu0 0.0
    %1534 = vmatprep.mubr.f32.mxu0 0.0
    %1535 = vmatmul.mubr.f32.gmra.mrb[0].mxu0 %v1468
    %v1536 = vpop.f32.mrb[0].mxu0
    %v1537 = vadd.f32 %v1463, %v1536
    %v1538 = vpop.f32.mrb[0].mxu0
    %v1539 = vadd.f32 %v1465, %v1538
    %1540 = vdwg.mxu0
    %1541 = vrot.lane.b32.xlu0 %v872, 111
    %v1542 = vpop.permute.xlu0 %1541
    %1543 = vrot.lane.b32.xlu0 %v873, 111
    %v1544 = vpop.permute.xlu0 %1543
    %v1545 = vsel %vm773, %v1542, %v1544
    %v1546 = vsel %vm773, %v1544, %v1542
    %v1547 = vsel %vm778, %v1545, 0.0
    %v1548 = vsel %vm779, %v1546, 0.0
    %s1549 = scalar_lea.vmem %s3, 64
    %v1550 = vld [vmem:[%s1549] sm:$0xff]
    %v1552 = vsel %vm95, %v1550, 0
    %1554 = vmatprep.subr.mxu0 %v1548
    %1555 = vmatpush1.msra.mxu0 %v1547
    %1556 = vmatprep.subr.mxu0 0.0
    %1557 = vmatpush1.msra.mxu0 0.0
    %1558 = vmatprep.subr.mxu0 0.0
    %1559 = vmatpush1.msra.mxu0 0.0
    %1560 = vmatprep.subr.mxu0 0.0
    %1561 = vmatpush1.msra.mxu0 0.0
    %1562 = vmatprep.subr.mxu0 0.0
    %1563 = vmatpush1.msra.mxu0 0.0
    %1564 = vmatprep.subr.mxu0 0.0
    %1565 = vmatpush1.msra.mxu0 0.0
    %1566 = vmatprep.subr.mxu0 0.0
    %1567 = vmatpush1.msra.mxu0 0.0
    %1568 = vmatprep.subr.mxu0 0.0
    %1569 = vmatpush1.msra.mxu0 0.0
    %1570 = vmatprep.subr.mxu0 0.0
    %1571 = vmatpush1.msra.mxu0 0.0
    %1572 = vmatprep.subr.mxu0 0.0
    %1573 = vmatpush1.msra.mxu0 0.0
    %1574 = vmatprep.subr.mxu0 0.0
    %1575 = vmatpush1.msra.mxu0 0.0
    %1576 = vmatprep.subr.mxu0 0.0
    %1577 = vmatpush1.msra.mxu0 0.0
    %1578 = vmatprep.subr.mxu0 0.0
    %1579 = vmatpush1.msra.mxu0 0.0
    %1580 = vmatprep.subr.mxu0 0.0
    %1581 = vmatpush1.msra.mxu0 0.0
    %1582 = vmatprep.subr.mxu0 0.0
    %1583 = vmatpush1.msra.mxu0 0.0
    %1584 = vmatprep.subr.mxu0 0.0
    %1585 = vmatpush1.msra.mxu0 0.0
    %1586 = vmatprep.subr.mxu0 0.0
    %1587 = vmatpush1.msra.mxu0 0.0
    %1588 = vmatprep.subr.mxu0 0.0
    %1589 = vmatpush1.msra.mxu0 0.0
    %1590 = vmatprep.subr.mxu0 0.0
    %1591 = vmatpush1.msra.mxu0 0.0
    %1592 = vmatprep.subr.mxu0 0.0
    %1593 = vmatpush1.msra.mxu0 0.0
    %1594 = vmatprep.subr.mxu0 0.0
    %1595 = vmatpush1.msra.mxu0 0.0
    %1596 = vmatprep.subr.mxu0 0.0
    %1597 = vmatpush1.msra.mxu0 0.0
    %1598 = vmatprep.subr.mxu0 0.0
    %1599 = vmatpush1.msra.mxu0 0.0
    %1600 = vmatprep.subr.mxu0 0.0
    %1601 = vmatpush1.msra.mxu0 0.0
    %1602 = vmatprep.subr.mxu0 0.0
    %1603 = vmatpush1.msra.mxu0 0.0
    %1604 = vmatprep.subr.mxu0 0.0
    %1605 = vmatpush1.msra.mxu0 0.0
    %1606 = vmatprep.subr.mxu0 0.0
    %1607 = vmatpush1.msra.mxu0 0.0
    %1608 = vmatprep.subr.mxu0 0.0
    %1609 = vmatpush1.msra.mxu0 0.0
    %1610 = vmatprep.subr.mxu0 0.0
    %1611 = vmatpush1.msra.mxu0 0.0
    %1612 = vmatprep.subr.mxu0 0.0
    %1613 = vmatpush1.msra.mxu0 0.0
    %1614 = vmatprep.subr.mxu0 0.0
    %1615 = vmatpush1.msra.mxu0 0.0
    %1616 = vmatprep.subr.mxu0 0.0
    %1617 = vmatpush1.msra.mxu0 0.0
    %1618 = vmatprep.mubr.f32.mxu0 0.0
    %1619 = vmatmul.mubr.f32.gmra.mrb[0].mxu0 %v1552
    %v1620 = vpop.f32.mrb[0].mxu0
    %v1621 = vadd.f32 0.0, %v1620
    %v1622 = vpop.f32.mrb[0].mxu0
    %v1623 = vadd.f32 0.0, %v1622
    %1624 = vdwg.mxu0
    %v1625 = vadd.f32 %v1537, %v1621
    %v1626 = vadd.f32 %v1539, %v1623
    %v1627 = vadd.f32 %v1125, %v1371
    %v1628 = vadd.f32 %v1126, %v1372
    %v1629 = vadd.f32 %v1627, %v1625
    %v1630 = vadd.f32 %v1628, %v1626
    %v1631 = vld [vmem:[%s4] sm:$0xff]
    %1633 = vset.pattern.permute.xlu0 0
    %1634 = vperm.xlu0 %1633, %v1631
    %v1635 = vpop.permute.xlu0 %1634
    %v1637 = vadd.f32 %v1629, %v1635
    %v1638 = vadd.f32 %v1630, %v1635
    %v1639 = vadd.f32 %v1637, %v64
    %v1640 = vadd.f32 %v1638, %v65
    %v1641 = vmax.f32 %v1639, 0.0
    %v1642 = vmax.f32 %v1640, 0.0
    %1643 = vst [vmem:[#allocation2] sm:$0xff] %v1641
    %1644 = vst [vmem:[#allocation2 + $0x8] sm:$0xff] %v1642
    // Predicated region
    $region22: #{tpu_custom_call.1} parent=1 // pred_check
      _
    $region23: #{tpu_custom_call.1} parent=1 // pred_check_branch
      %1646 = sbr.rel (0) target = $region25
    $region24: #{tpu_custom_call.1} parent=1 // pred_region
      %s1648 = ssub.s32 256, 256
      %1649 = vsyncadd [#allocation3], %s1648
      %s1651 = sshll.u32 [#allocation2], 4
      %s1652 = int_to_ptr.vmem [resolvable:$true] %s1651
      %1654 = dma.vmem_to_hbm [thread:$0]  %s1652, 256, %s5, [#allocation3]
    $region25: #{tpu_custom_call.1} parent=1 // pred_fallthru
      _
    // Predicated region
    $region26: #{tpu_custom_call.1} parent=1 // pred_check
      _
    $region27: #{tpu_custom_call.1} parent=1 // pred_check_branch
      %1656 = sbr.rel (0) target = $region29
    $region28: #{tpu_custom_call.1} parent=1 // pred_region
      %1657 = dma.done [#allocation3], 256
    $region29: #{tpu_custom_call.1} parent=1 // pred_fallthru
      _
    %1658 = vsyncpa [#allocation3], 1

</llo_original>
